<compile_context>
chip_gen: v7x
topology: tpu7x:2x2x1
jax: 0.10.0
libtpu: 0.0.40
codegen_flags: <defaults>
</compile_context>

<pallas_src>
import math

import jax
import jax.numpy as jnp
from jax.experimental import pallas as pl
from jax.experimental.pallas import tpu as pltpu

BN_EPS = 1e-5
LANE = 128
# f32 = portable (incl. v5e); flip to jnp.bfloat16 on v6e/v7x for a faster
# depthwise stage (bf16 VALU) and half the scratch VMEM.
HIDDEN_DTYPE = jnp.float32


def _round_up(n, m):
    return ((n + m - 1) // m) * m


# ----------------------------------------------------------------------------
# Fused inverted-residual kernel
# ----------------------------------------------------------------------------


def _make_inverted_residual_kernel(*, stride, tile, win, seq_len, use_res,
                                   has_expand, t_right):
    """Build the fused kernel body for one (batch, L-tile) grid step.

    Ref layout (all channel dims padded to 128 lanes):
      x_ref : (1, stride, wpp, Cin_p)  bf16  phase-split, zero-padded input
      we/be : (Cin_p, H_p) bf16 / (1, H_p) f32       [only if has_expand]
      wd    : (3, 1, H_p) f32   depthwise taps (BN folded)
      bd    : (1, H_p) f32
      wp/bp : (H_p, Cout_p) bf16 / (1, Cout_p) f32
      o_ref : (1, tile, Cout_p) bf16
      h_ref : VMEM scratch (stride, win, H_p)  -- expanded hidden activation
    """

    def kernel(*refs):
        if has_expand:
            (x_ref, we_ref, be_ref, wd_ref, bd_ref, wp_ref, bp_ref,
             o_ref, h_ref) = refs
        else:
            (x_ref, wd_ref, bd_ref, wp_ref, bp_ref, o_ref, h_ref) = refs
            we_ref = be_ref = None

        t = pl.program_id(1)
        j0 = pl.multiple_of(t * tile, tile)          # window start (phase rows)

        # ---- expand 1x1 conv + folded BN + ReLU6: ONE MXU matmul covering
        #      every stride-phase (phases stacked on the M axis; `win` is a
        #      multiple of 16 so the collapse is a free layout cast).
        #      Result stays on-chip in the VMEM scratch h_ref. ----
        xw = x_ref[0, :, pl.ds(j0, win), :]            # (s, win, Cin_p) bf16
        xw = xw.reshape(stride * win, xw.shape[-1])    # (s*win, Cin_p)
        if has_expand:
            h = jnp.dot(xw, we_ref[...], preferred_element_type=jnp.float32)
            h = jnp.clip(h + be_ref[...], 0.0, 6.0)
        else:
            h = xw.astype(jnp.float32)
        for p in range(stride):
            h_ref[p] = h[p * win:(p + 1) * win].astype(h_ref.dtype)

        # ---- boundary masking: rows whose (depthwise-)padded position falls
        #      outside [1, seq_len] are the depthwise conv's zero padding /
        #      window slack and must be exactly 0.  Only the expand path makes
        #      them nonzero (ReLU6(bias)), and only the first tile / tiles
        #      reaching past seq_len contain such rows -> pl.when-gated. ----
        if has_expand:
            @pl.when(jnp.logical_or(t == 0, t >= t_right))
            def _():
                base = (j0 + jax.lax.broadcasted_iota(jnp.int32, (win, 1), 0)
                        ) * stride
                for p in range(stride):
                    pos = base + p
                    valid = jnp.logical_and(pos >= 1, pos <= seq_len)
                    h_ref[p] = jnp.where(valid, h_ref[p], 0.0)

        # ---- depthwise 3-tap conv + folded BN + ReLU6 (VPU).
        #      Tap k of output row j reads hidden position j*stride + k, i.e.
        #      phase (k % stride), row offset (k // stride) in the window. ----
        wdt = wd_ref[...].astype(h_ref.dtype)          # (3, 1, H_p)
        d = h_ref[0, 0:tile, :] * wdt[0]
        for k in (1, 2):
            ph, off = k % stride, k // stride
            d = d + h_ref[ph, off:off + tile, :] * wdt[k]
        d = jnp.clip(d.astype(jnp.float32) + bd_ref[...], 0.0, 6.0)

        # ---- project 1x1 conv + folded BN (MXU) + optional residual ----
        y = jnp.dot(d.astype(jnp.bfloat16), wp_ref[...],
                    preferred_element_type=jnp.float32) + bp_ref[...]
        if use_res:                                    # stride == 1, inp == oup
            res = x_ref[0, 0, pl.ds(j0, win), :].astype(jnp.float32)
            y = y + res[1:1 + tile, :]
        o_ref[0] = y.astype(o_ref.dtype)

    return kernel


def inverted_residual_pallas(x_padded, kp, *, tile=512):
    """One fused InvertedResidual block.

    x_padded : (B, L, Cin_p) bf16, channels-last, channels zero-padded to 128.
    Returns    (B, L_out, Cout_p) bf16 (channels still padded).
    """
    b, seq_len, cin_p = x_padded.shape
    s = kp["stride"]
    l_out = (seq_len - 1) // s + 1

    # L-tile: the one tuning knob.  Multiple of 16 so dynamic bf16 window
    # starts and the phase-collapse reshape stay fully aligned.
    tile = _round_up(max(16, min(tile, _round_up(l_out, 16))), 16)
    num_t = pl.cdiv(l_out, tile)
    win = tile + 16                             # output tile + tap halo
    wpp = num_t * tile + 16                     # rows per stride-phase
    h_p, cout_p = kp["h_p"], kp["cout_p"]
    has_expand = kp["we"] is not None

    # First tile index whose window can contain rows past seq_len (right
    # depthwise pad / slack); the left-pad row only lives in tile 0.
    lim = seq_len + 1 - win * s
    t_right = 0 if lim < 0 else lim // (tile * s) + 1

    # Host-side prep: 1 leading zero (left depthwise pad) + zero tail, then the
    # length axis is split into `stride` interleaved phases so every in-kernel
    # tap is a contiguous unit-stride slice.
    # (For stride-2 this materializes one transposed copy in HBM; keeping the
    #  previous block's output already phase-split would remove it.)
    total = s * wpp
    xp = jnp.pad(x_padded, ((0, 0), (1, total - seq_len - 1), (0, 0)))
    if s > 1:
        xp = jnp.transpose(xp.reshape(b, wpp, s, cin_p), (0, 2, 1, 3))
    else:
        xp = xp[:, None, :, :]                  # (B, 1, wpp, Cin_p), no copy

    kernel = _make_inverted_residual_kernel(
        stride=s, tile=tile, win=win, seq_len=seq_len,
        use_res=kp["use_res"], has_expand=has_expand, t_right=t_right)

    def _full(arr):
        return pl.BlockSpec(arr.shape, lambda bb, tt, _n=arr.ndim: (0,) * _n)

    # Whole phase-split input for batch bb stays resident across the L-tile
    # axis (index map ignores tt) -> DMA'd once per batch element.
    in_specs = [pl.BlockSpec((1, s, wpp, cin_p), lambda bb, tt: (bb, 0, 0, 0))]
    args = [xp]
    if has_expand:
        in_specs += [_full(kp["we"]), _full(kp["be"])]
        args += [kp["we"], kp["be"]]
    for name in ("wd", "bd", "wp", "bp"):
        in_specs.append(_full(kp[name]))
        args.append(kp[name])

    # Explicit VMEM budget (v5e default scoped VMEM is only 16 MiB; v7x has
    # 64 MiB physical): double-buffered input/weights/output + hidden scratch.
    w_bytes = sum(int(a.size) * a.dtype.itemsize for a in args[1:])
    x_block = s * wpp * cin_p * 2
    o_block = tile * cout_p * 2
    scratch_bytes = s * win * h_p * jnp.dtype(HIDDEN_DTYPE).itemsize
    needed = 2 * (x_block + w_bytes + o_block) + scratch_bytes
    vmem_limit = int(min(max(needed + (8 << 20), 32 << 20), 64 << 20))

    flops = int(b * num_t * (2 * s * win * cin_p * h_p * int(has_expand)
                             + 2 * tile * h_p * cout_p + 10 * tile * h_p))
    bytes_accessed = int(xp.size * 2 + w_bytes + b * num_t * tile * cout_p * 2)

    y = pl.pallas_call(
        kernel,
        out_shape=jax.ShapeDtypeStruct((b, num_t * tile, cout_p), jnp.bfloat16),
        grid=(b, num_t),
        in_specs=in_specs,
        out_specs=pl.BlockSpec((1, tile, cout_p), lambda bb, tt: (bb, tt, 0)),
        scratch_shapes=[pltpu.VMEM((s, win, h_p), HIDDEN_DTYPE)],
        compiler_params=pltpu.CompilerParams(
            dimension_semantics=("parallel", "parallel"),
            vmem_limit_bytes=vmem_limit),
        cost_estimate=pl.CostEstimate(flops=flops, transcendentals=0,
                                      bytes_accessed=bytes_accessed),
    )(*args)
    # Rows >= l_out of the last tile are finite but meaningless: keep this slice.
    return y[:, :l_out, :]


# ----------------------------------------------------------------------------
# Parameters: raw PyTorch-style weights, BN folding + lane padding + bf16 cast
# ----------------------------------------------------------------------------


def make_raw_block(key, *, inp, oup, stride, expand_ratio):
    """Random parameters for one PyTorch InvertedResidual block (eval mode)."""
    assert stride in (1, 2)
    hidden = int(round(inp * expand_ratio))
    ks = jax.random.split(key, 16)

    def bn(i, c):           # (gamma, beta, running_mean, running_var)
        return (1.0 + 0.1 * jax.random.normal(ks[i], (c,), jnp.float32),
                0.2 * jax.random.normal(ks[i + 1], (c,), jnp.float32),
                0.1 * jax.random.normal(ks[i + 2], (c,), jnp.float32),
                0.5 + jax.random.uniform(ks[i + 3], (c,), jnp.float32))

    raw = dict(inp=inp, oup=oup, stride=stride, expand_ratio=expand_ratio,
               hidden=hidden)
    if expand_ratio != 1:
        raw["we"] = (math.sqrt(2.0 / hidden)
                     * jax.random.normal(ks[12], (hidden, inp, 1), jnp.float32))
        raw["bn1"] = bn(0, hidden)
    else:
        raw["we"], raw["bn1"] = None, None
    raw["wd"] = (math.sqrt(2.0 / 3.0)
                 * jax.random.normal(ks[13], (hidden, 1, 3), jnp.float32))
    raw["bn2"] = bn(4, hidden)
    raw["wp"] = (math.sqrt(2.0 / oup)
                 * jax.random.normal(ks[14], (oup, hidden, 1), jnp.float32))
    raw["bn3"] = bn(8, oup)
    return raw


def _bn_fold(bn):
    g, b, m, v = bn
    scale = g / jnp.sqrt(v + BN_EPS)
    return scale, b - m * scale


def fold_block_params(raw):
    """Fold eval-mode BN into the convs, zero-pad channels to 128 lanes, cast
    matmul weights to bf16.  Padded rows/cols are zero so padded channels stay
    exactly zero through the whole block."""
    inp, oup, s, hidden = raw["inp"], raw["oup"], raw["stride"], raw["hidden"]
    cin_p = _round_up(inp, LANE)
    h_p = _round_up(hidden, LANE)
    cout_p = _round_up(oup, LANE)
    kp = dict(stride=s, inp=inp, oup=oup, cin_p=cin_p, h_p=h_p, cout_p=cout_p,
              use_res=(s == 1 and inp == oup))

    if raw["we"] is not None:
        sc, sh = _bn_fold(raw["bn1"])
        we = jnp.zeros((cin_p, h_p), jnp.float32)
        we = we.at[:inp, :hidden].set(raw["we"][:, :, 0].T * sc[None, :])
        kp["we"] = we.astype(jnp.bfloat16)
        kp["be"] = jnp.zeros((1, h_p), jnp.float32).at[0, :hidden].set(sh)
    else:
        assert h_p == cin_p            # expand_ratio == 1  ->  hidden == inp
        kp["we"], kp["be"] = None, None

    sc, sh = _bn_fold(raw["bn2"])
    wd = jnp.zeros((3, 1, h_p), jnp.float32)
    for k in range(3):
        wd = wd.at[k, 0, :hidden].set(raw["wd"][:, 0, k] * sc)
    kp["wd"] = wd
    kp["bd"] = jnp.zeros((1, h_p), jnp.float32).at[0, :hidden].set(sh)

    sc, sh = _bn_fold(raw["bn3"])
    wp = jnp.zeros((h_p, cout_p), jnp.float32)
    wp = wp.at[:hidden, :oup].set(raw["wp"][:, :, 0].T * sc[None, :])
    kp["wp"] = wp.astype(jnp.bfloat16)
    kp["bp"] = jnp.zeros((1, cout_p), jnp.float32).at[0, :oup].set(sh)
    return kp


def run_block(x_f32, kp, *, tile=512):
    """Channels-last f32 (B, L, Cin) -> (B, L_out, Cout) f32 via the kernel."""
    b, l, c = x_f32.shape
    assert c == kp["inp"]
    xpad = jnp.zeros((b, l, kp["cin_p"]), jnp.bfloat16)
    xpad = xpad.at[:, :, :c].set(x_f32.astype(jnp.bfloat16))
    y = inverted_residual_pallas(xpad, kp, tile=tile)
    return y[:, :, :kp["oup"]].astype(jnp.float32)


# ----------------------------------------------------------------------------
# Plain-JAX f32 reference (mirrors the PyTorch module in eval mode)
# ----------------------------------------------------------------------------


def _bn_eval(x, bn):
    g, b, m, v = bn
    return (x - m) * (g / jnp.sqrt(v + BN_EPS)) + b


def ref_inverted_residual(x, raw):
    """Channels-last f32 reference: x (B, L, Cin) -> (B, L_out, Cout)."""
    inp, oup, s = raw["inp"], raw["oup"], raw["stride"]
    h = x
    if raw["we"] is not None:
        h = jnp.clip(_bn_eval(h @ raw["we"][:, :, 0].T, raw["bn1"]), 0.0, 6.0)
    l = h.shape[1]
    l_out = (l - 1) // s + 1
    hp = jnp.pad(h, ((0, 0), (1, 1), (0, 0)))
    d = None
    for k in range(3):
        tap = hp[:, k:k + (l_out - 1) * s + 1:s, :] * raw["wd"][None, None, :, 0, k]
        d = tap if d is None else d + tap
    d = jnp.clip(_bn_eval(d, raw["bn2"]), 0.0, 6.0)
    y = _bn_eval(d @ raw["wp"][:, :, 0].T, raw["bn3"])
    if s == 1 and inp == oup:
        y = y + x
    return y


# ----------------------------------------------------------------------------


if __name__ == "__main__":
    key = jax.random.PRNGKey(0)
    kx, k0, k1, k2 = jax.random.split(key, 4)

    # Channels-last view of a PyTorch (B=2, C=32, L=248) activation.
    B, L, C0 = 2, 248, 32
    x = jax.random.normal(kx, (B, L, C0), jnp.float32)

    # Three block configs covering every code path: no-expand+residual,
    # expand+residual (stride 1), expand+stride-2 (no residual).
    cfgs = [dict(inp=32, oup=32, stride=1, expand_ratio=1),
            dict(inp=32, oup=32, stride=1, expand_ratio=6),
            dict(inp=32, oup=64, stride=2, expand_ratio=6)]
    raws = [make_raw_block(k, **c) for k, c in zip((k0, k1, k2), cfgs)]
    kps = [fold_block_params(r) for r in raws]

    def check(y_val, y_ref):
        assert y_val.shape == y_ref.shape
        assert bool(jnp.all(jnp.isfinite(y_val)))
        diff = jnp.abs(y_val - y_ref)
        assert bool(jnp.allclose(y_val, y_ref, atol=2e-1, rtol=5e-2)), \
            float(jnp.max(diff))
        assert float(jnp.mean(diff)) < 3e-2, float(jnp.mean(diff))

    h_ref = x     # plain-JAX f32 reference chain
    h_pal = x     # fused-Pallas chain
    for raw, kp in zip(raws, kps):
        y_ref = ref_inverted_residual(h_ref, raw)
        y_val = run_block(h_ref, kp)              # default (large) tile
        jax.block_until_ready(y_val)
        check(y_val, y_ref)
        y_small = run_block(h_ref, kp, tile=64)   # multi-tile / pl.when paths
        jax.block_until_ready(y_small)
        check(y_small, y_ref)
        h_pal = run_block(h_pal, kp)              # chained Pallas path
        h_ref = y_ref

    jax.block_until_ready(h_pal)
    assert h_pal.shape == (B, (L - 1) // 2 + 1, 64)
    assert bool(jnp.all(jnp.isfinite(h_pal)))
    print("KERNEL_OK")
</pallas_src>

<mosaic_0001>
module attributes {stable_mosaic.version = 11 : i64} {
  func.func @kernel(%arg0: i32, %arg1: i32, %arg2: memref<1x1x272x128xbf16, #tpu.memory_space<vmem>>, %arg3: memref<3x1x128xf32, #tpu.memory_space<vmem>>, %arg4: memref<1x128xf32, #tpu.memory_space<vmem>>, %arg5: memref<128x128xbf16, #tpu.memory_space<vmem>>, %arg6: memref<1x128xf32, #tpu.memory_space<vmem>>, %arg7: memref<1x256x128xbf16, #tpu.memory_space<vmem>>, %arg8: memref<1x272x128xf32, #tpu.memory_space<vmem>>) attributes {dimension_semantics = [#tpu.dimension_semantics<parallel>, #tpu.dimension_semantics<parallel>], iteration_bounds = array<i64: 2, 1>, scalar_prefetch = 0 : i64, scratch_operands = 1 : i64, tpu.core_type = #tpu.core_type<tc>, window_params = [{transform_indices = @transform_0, window_bounds = array<i64: 1, 1, 272, 128>}, {pipeline_mode = #tpu.pipeline_mode<synchronous>, transform_indices = @transform_1, window_bounds = array<i64: 3, 1, 128>}, {pipeline_mode = #tpu.pipeline_mode<synchronous>, transform_indices = @transform_2, window_bounds = array<i64: 1, 128>}, {pipeline_mode = #tpu.pipeline_mode<synchronous>, transform_indices = @transform_3, window_bounds = array<i64: 128, 128>}, {pipeline_mode = #tpu.pipeline_mode<synchronous>, transform_indices = @transform_4, window_bounds = array<i64: 1, 128>}, {transform_indices = @transform_5, window_bounds = array<i64: 1, 256, 128>}]} {
    %c256_i32 = arith.constant 256 : i32
    %0 = arith.muli %arg1, %c256_i32 : i32
    %1 = tpu.assume_multiple %0, 256 : i32
    %c0 = arith.constant 0 : index
    %c0_0 = arith.constant 0 : index
    %2 = arith.index_cast %1 : i32 to index
    %c0_1 = arith.constant 0 : index
    %3 = vector.load %arg2[%c0, %c0_0, %2, %c0_1] : memref<1x1x272x128xbf16, #tpu.memory_space<vmem>>, vector<1x1x272x128xbf16>
    %4 = vector.shape_cast %3 : vector<1x1x272x128xbf16> to vector<1x272x128xbf16>
    %5 = vector.shape_cast %4 : vector<1x272x128xbf16> to vector<272x128xbf16>
    %6 = arith.extf %5 : vector<272x128xbf16> to vector<272x128xf32>
    %c0_2 = arith.constant 0 : index
    %c0_3 = arith.constant 0 : index
    %c0_4 = arith.constant 0 : index
    %7 = vector.load %arg8[%c0_2, %c0_3, %c0_4] : memref<1x272x128xf32, #tpu.memory_space<vmem>>, vector<1x272x128xf32>
    %8 = vector.shape_cast %7 : vector<1x272x128xf32> to vector<272x128xf32>
    %9 = vector.shape_cast %6 : vector<272x128xf32> to vector<1x272x128xf32>
    tpu.vector_store %arg8[%c0_2, %c0_3, %c0_4], %9 {strides = array<i32>} : memref<1x272x128xf32, #tpu.memory_space<vmem>>, vector<1x272x128xf32>,
    %c0_5 = arith.constant 0 : index
    %c0_6 = arith.constant 0 : index
    %c0_7 = arith.constant 0 : index
    %10 = vector.load %arg3[%c0_5, %c0_6, %c0_7] : memref<3x1x128xf32, #tpu.memory_space<vmem>>, vector<3x1x128xf32>
    %c0_8 = arith.constant 0 : index
    %c0_9 = arith.constant 0 : index
    %c0_10 = arith.constant 0 : index
    %11 = vector.load %arg8[%c0_8, %c0_9, %c0_10] : memref<1x272x128xf32, #tpu.memory_space<vmem>>, vector<1x256x128xf32>
    %12 = vector.shape_cast %11 : vector<1x256x128xf32> to vector<256x128xf32>
    %13 = vector.extract_strided_slice %10 {offsets = [0, 0, 0], sizes = [1, 1, 128], strides = [1, 1, 1]} : vector<3x1x128xf32> to vector<1x1x128xf32>
    %14 = vector.shape_cast %13 : vector<1x1x128xf32> to vector<1x128xf32>
    %15 = vector.broadcast %14 : vector<1x128xf32> to vector<256x128xf32>
    %16 = arith.mulf %12, %15 : vector<256x128xf32>
    %c0_11 = arith.constant 0 : index
    %c1 = arith.constant 1 : index
    %c0_12 = arith.constant 0 : index
    %17 = vector.load %arg8[%c0_11, %c1, %c0_12] : memref<1x272x128xf32, #tpu.memory_space<vmem>>, vector<1x256x128xf32>
    %18 = vector.shape_cast %17 : vector<1x256x128xf32> to vector<256x128xf32>
    %19 = vector.extract_strided_slice %10 {offsets = [1, 0, 0], sizes = [1, 1, 128], strides = [1, 1, 1]} : vector<3x1x128xf32> to vector<1x1x128xf32>
    %20 = vector.shape_cast %19 : vector<1x1x128xf32> to vector<1x128xf32>
    %21 = vector.broadcast %20 : vector<1x128xf32> to vector<256x128xf32>
    %22 = arith.mulf %18, %21 : vector<256x128xf32>
    %23 = arith.addf %16, %22 : vector<256x128xf32>
    %c0_13 = arith.constant 0 : index
    %c2 = arith.constant 2 : index
    %c0_14 = arith.constant 0 : index
    %24 = vector.load %arg8[%c0_13, %c2, %c0_14] : memref<1x272x128xf32, #tpu.memory_space<vmem>>, vector<1x256x128xf32>
    %25 = vector.shape_cast %24 : vector<1x256x128xf32> to vector<256x128xf32>
    %26 = vector.extract_strided_slice %10 {offsets = [2, 0, 0], sizes = [1, 1, 128], strides = [1, 1, 1]} : vector<3x1x128xf32> to vector<1x1x128xf32>
    %27 = vector.shape_cast %26 : vector<1x1x128xf32> to vector<1x128xf32>
    %28 = vector.broadcast %27 : vector<1x128xf32> to vector<256x128xf32>
    %29 = arith.mulf %25, %28 : vector<256x128xf32>
    %30 = arith.addf %23, %29 : vector<256x128xf32>
    %c0_15 = arith.constant 0 : index
    %c0_16 = arith.constant 0 : index
    %31 = vector.load %arg4[%c0_15, %c0_16] : memref<1x128xf32, #tpu.memory_space<vmem>>, vector<1x128xf32>
    %32 = vector.broadcast %31 : vector<1x128xf32> to vector<256x128xf32>
    %33 = arith.addf %30, %32 : vector<256x128xf32>
    %cst = arith.constant 0.000000e+00 : f32
    %cst_17 = arith.constant 6.000000e+00 : f32
    %34 = vector.broadcast %cst : f32 to vector<256x128xf32>
    %35 = arith.maximumf %34, %33 : vector<256x128xf32>
    %36 = vector.broadcast %cst_17 : f32 to vector<256x128xf32>
    %37 = arith.minimumf %36, %35 : vector<256x128xf32>
    %38 = arith.truncf %37 : vector<256x128xf32> to vector<256x128xbf16>
    %c0_18 = arith.constant 0 : index
    %c0_19 = arith.constant 0 : index
    %39 = vector.load %arg5[%c0_18, %c0_19] : memref<128x128xbf16, #tpu.memory_space<vmem>>, vector<128x128xbf16>
    %cst_20 = arith.constant dense<0.000000e+00> : vector<256x128xf32>
    %40 = tpu.matmul %38, %39, %cst_20 {dimension_numbers = #tpu.dot_dimension_numbers<[1], [0], [0], [1], [0, 0, 1, 1], [], []>} : vector<256x128xbf16>, vector<128x128xbf16>, vector<256x128xf32> -> vector<256x128xf32>
    %c0_21 = arith.constant 0 : index
    %c0_22 = arith.constant 0 : index
    %41 = vector.load %arg6[%c0_21, %c0_22] : memref<1x128xf32, #tpu.memory_space<vmem>>, vector<1x128xf32>
    %42 = vector.broadcast %41 : vector<1x128xf32> to vector<256x128xf32>
    %43 = arith.addf %40, %42 : vector<256x128xf32>
    %c0_23 = arith.constant 0 : index
    %c0_24 = arith.constant 0 : index
    %44 = arith.index_cast %1 : i32 to index
    %c0_25 = arith.constant 0 : index
    %45 = vector.load %arg2[%c0_23, %c0_24, %44, %c0_25] : memref<1x1x272x128xbf16, #tpu.memory_space<vmem>>, vector<1x1x272x128xbf16>
    %46 = vector.shape_cast %45 : vector<1x1x272x128xbf16> to vector<272x128xbf16>
    %47 = arith.extf %46 : vector<272x128xbf16> to vector<272x128xf32>
    %48 = vector.extract_strided_slice %47 {offsets = [1, 0], sizes = [256, 128], strides = [1, 1]} : vector<272x128xf32> to vector<256x128xf32>
    %49 = arith.addf %43, %48 : vector<256x128xf32>
    %50 = arith.truncf %49 : vector<256x128xf32> to vector<256x128xbf16>
    %c0_26 = arith.constant 0 : index
    %c0_27 = arith.constant 0 : index
    %c0_28 = arith.constant 0 : index
    %51 = vector.load %arg7[%c0_26, %c0_27, %c0_28] : memref<1x256x128xbf16, #tpu.memory_space<vmem>>, vector<1x256x128xbf16>
    %52 = vector.shape_cast %51 : vector<1x256x128xbf16> to vector<256x128xbf16>
    %53 = vector.shape_cast %50 : vector<256x128xbf16> to vector<1x256x128xbf16>
    tpu.vector_store %arg7[%c0_26, %c0_27, %c0_28], %53 {strides = array<i32>} : memref<1x256x128xbf16, #tpu.memory_space<vmem>>, vector<1x256x128xbf16>,
    return
  }
  func.func @transform_0(%arg0: i32, %arg1: i32) -> (i32, i32, i32, i32) {
    %c0_i32 = arith.constant 0 : i32
    %c0_i32_0 = arith.constant 0 : i32
    %c0_i32_1 = arith.constant 0 : i32
    %c0_i32_2 = arith.constant 0 : i32
    return %arg0, %c0_i32, %c0_i32_0, %c0_i32_1 : i32, i32, i32, i32
  }
  func.func @transform_1(%arg0: i32, %arg1: i32) -> (i32, i32, i32) {
    %c0_i32 = arith.constant 0 : i32
    %c0_i32_0 = arith.constant 0 : i32
    %c0_i32_1 = arith.constant 0 : i32
    %c0_i32_2 = arith.constant 0 : i32
    return %c0_i32, %c0_i32_0, %c0_i32_1 : i32, i32, i32
  }
  func.func @transform_2(%arg0: i32, %arg1: i32) -> (i32, i32) {
    %c0_i32 = arith.constant 0 : i32
    %c0_i32_0 = arith.constant 0 : i32
    %c0_i32_1 = arith.constant 0 : i32
    return %c0_i32, %c0_i32_0 : i32, i32
  }
  func.func @transform_3(%arg0: i32, %arg1: i32) -> (i32, i32) {
    %c0_i32 = arith.constant 0 : i32
    %c0_i32_0 = arith.constant 0 : i32
    %c0_i32_1 = arith.constant 0 : i32
    return %c0_i32, %c0_i32_0 : i32, i32
  }
  func.func @transform_4(%arg0: i32, %arg1: i32) -> (i32, i32) {
    %c0_i32 = arith.constant 0 : i32
    %c0_i32_0 = arith.constant 0 : i32
    %c0_i32_1 = arith.constant 0 : i32
    return %c0_i32, %c0_i32_0 : i32, i32
  }
  func.func @transform_5(%arg0: i32, %arg1: i32) -> (i32, i32, i32) {
    %c0_i32 = arith.constant 0 : i32
    %c0_i32_0 = arith.constant 0 : i32
    return %arg0, %arg1, %c0_i32 : i32, i32, i32
  }
}

</mosaic_0001>

<llo_original>
// kernel: tpu_custom_call.1
$region0: #{tpu_custom_call.1}
  #allocation0 [shape = 'u32[]', space=smem, size = 0x4, offset = 0x4, fixed_abs, tag = 'smem constant byte address 0x4 - core index']
  #allocation1 [shape = 'u32[144,128]{1,0:T(1,128)}', space=vmem, size = 0x12000, scoped, tag = 'internal scratch']
  #allocation2 [shape = 'f32[1,272,128]{2,1,0:T(8,128)}', space=vmem, size = 0x22000, scoped, tag = 'scratch operand']
  %s0 = inlined_call_operand.hbm [shape: bf16[2,1,272,128], index: 0, kind: input, shape index: {}]
  %s1 = inlined_call_operand.vmem [shape: f32[3,1,128], index: 1, kind: input, shape index: {}]
  %s2 = inlined_call_operand.vmem [shape: f32[1,128], index: 2, kind: input, shape index: {}]
  %s3 = inlined_call_operand.hbm [shape: bf16[128,128], index: 3, kind: input, shape index: {}]
  %s4 = inlined_call_operand.vmem [shape: f32[1,128], index: 4, kind: input, shape index: {}]
  %s5 = inlined_call_operand.hbm [shape: bf16[2,256,128], index: 5, kind: output, shape index: {}]
  %s6 = sld [smem:[#allocation0]]
  $region61: #{tpu_custom_call.1} parent=0
    _
  %s8 = ssub.s32 1, %s6
  %s9 = scalar_select 0, %s8, %s6
  $region1: #{tpu_custom_call.1} parent=0
    #allocation3 [shape = 'u8[139264]{0}', space=vmem, size = 0x22000, scoped, tag = 'input window, operand 0']
    #allocation4 [shape = 's32[2]{0}', space=sflag, size = 0x8, scoped, tag = 'scoped memory for tpu_custom_call.1']
    #allocation5 [shape = 's32[2]{0}', space=sflag, size = 0x8, scoped, tag = 'scoped memory for tpu_custom_call.1']
    #allocation6 [shape = 'u8[32768]{0}', space=vmem, size = 0x8000, scoped, tag = 'input window, operand 3, single buffered']
    #allocation7 [shape = 's32[1]{0}', space=sflag, size = 0x4, scoped, tag = 'scoped memory for tpu_custom_call.1']
    #allocation8 [shape = 'u8[131072]{0}', space=vmem, size = 0x20000, scoped, tag = 'output window, operand 0']
    %10 = vsyncpa [#allocation4], 0
    %s11 = scalar_lea.sflag [#allocation4], 1
    %12 = vsyncpa %s11, 0
    %13 = vsyncpa [#allocation7], 0
    %14 = vsyncpa [#allocation5], 0
    %s15 = scalar_lea.sflag [#allocation5], 1
    %16 = vsyncpa %s15, 0
    loop: start=0, step=1, limit=4
    $region2: #{tpu_custom_call.1} parent=1 // loop_pre_header
      _
    $region3: #{tpu_custom_call.1} parent=1 // loop_header
      %s18 = sphi 0, %s22
      %p19 = scmp.ge.s32.totalorder %s18, 4
      %s25 = sphi 0, %s37
      %s26 = sphi 0, %s33
      %s27 = sphi 0, %s25
      %s28 = sphi 0, %s26
      %s29 = sphi 0, %s27
      %s30 = sphi 0, %s28
      %s40 = sphi 0, %s42
      %s43 = sphi 0, %s40
      %s44 = sphi 0, %s43
      %s60 = sphi 0, %s44
      %s64 = sphi 0, %s64
      %s66 = sphi 0, %s64
      %s67 = sphi 0, %s66
      %s81 = sphi 0, %s67
      %s85 = sphi 0, %s85
      %s87 = sphi 0, %s85
      %s88 = sphi 0, %s87
      %s102 = sphi 0, %s88
      %s106 = sphi 0, %s106
      %s108 = sphi 0, %s106
      %s109 = sphi 0, %s108
      %s123 = sphi 0, %s109
      %s127 = sphi 0, %s127
      %s129 = sphi 0, %s127
      %s130 = sphi 0, %s129
      %s144 = sphi 0, %s130
      %s152 = sphi 0, %s154
      %s155 = sphi 0, %s152
      %s156 = sphi 0, %s155
      %s172 = sphi 0, %s156
    $region4: #{tpu_custom_call.1} parent=1 // loop_header_branch
      %21 = sbr.rel (%p19) target = $region8
    $region5: #{tpu_custom_call.1} parent=1 // loop_body
      %s23 = ssub.s32 %s18, 1
      %s24 = ssub.s32 %s18, 2
      %s31 = sadd.s32 1, %s26
      %p32 = scmp.ge.s32.totalorder %s31, 1
      %s33 = scalar_select %p32, 0, %s31
      %s34 = sadd.s32 1, %s25
      %s35 = scalar_select %p32, %s34, %s25
      %p36 = scmp.ge.s32.totalorder %s35, 2
      %s37 = scalar_select %p36, 0, %s35
      %s38 = ssub.s32 %s25, %s37
      %p39 = scmp.eq.s32.totalorder %s38, 0
      %s41 = sadd.s32 %s40, 1
      %s42 = scalar_select %p39, %s40, %s41
      %p45 = pneg %p39
      %p46 = scmp.eq.s32.totalorder %s18, 1
      %p47 = por %p45, %p46
      %p48 = scmp.ne.s32.totalorder %s40, %s43
      %p49 = scmp.eq.s32.totalorder %s18, 0
      %p50 = por %p48, %p49
      %p51 = scmp.ne.s32.totalorder %s40, %s43
      %p52 = scmp.eq.s32.totalorder %s23, 1
      %p53 = por %p51, %p52
      %p54 = scmp.ne.s32.totalorder %s43, %s44
      %p55 = scmp.eq.s32.totalorder %s23, 0
      %p56 = por %p54, %p55
      %p57 = scmp.ne.s32.totalorder %s43, %s44
      %p58 = scmp.eq.s32.totalorder %s24, 1
      %p59 = por %p57, %p58
      %p61 = scmp.ne.s32.totalorder %s44, %s60
      %p62 = scmp.eq.s32.totalorder %s24, 0
      %p63 = por %p61, %p62
      %s65 = sadd.s32 %s64, 1
      %p68 = scmp.eq.s32.totalorder %s18, 1
      %p69 = scmp.ne.s32.totalorder %s64, %s66
      %p70 = scmp.eq.s32.totalorder %s18, 0
      %p71 = por %p69, %p70
      %p72 = scmp.ne.s32.totalorder %s64, %s66
      %p73 = scmp.eq.s32.totalorder %s23, 1
      %p74 = por %p72, %p73
      %p75 = scmp.ne.s32.totalorder %s66, %s67
      %p76 = scmp.eq.s32.totalorder %s23, 0
      %p77 = por %p75, %p76
      %p78 = scmp.ne.s32.totalorder %s66, %s67
      %p79 = scmp.eq.s32.totalorder %s24, 1
      %p80 = por %p78, %p79
      %p82 = scmp.ne.s32.totalorder %s67, %s81
      %p83 = scmp.eq.s32.totalorder %s24, 0
      %p84 = por %p82, %p83
      %s86 = sadd.s32 %s85, 1
      %p89 = scmp.eq.s32.totalorder %s18, 1
      %p90 = scmp.ne.s32.totalorder %s85, %s87
      %p91 = scmp.eq.s32.totalorder %s18, 0
      %p92 = por %p90, %p91
      %p93 = scmp.ne.s32.totalorder %s85, %s87
      %p94 = scmp.eq.s32.totalorder %s23, 1
      %p95 = por %p93, %p94
      %p96 = scmp.ne.s32.totalorder %s87, %s88
      %p97 = scmp.eq.s32.totalorder %s23, 0
      %p98 = por %p96, %p97
      %p99 = scmp.ne.s32.totalorder %s87, %s88
      %p100 = scmp.eq.s32.totalorder %s24, 1
      %p101 = por %p99, %p100
      %p103 = scmp.ne.s32.totalorder %s88, %s102
      %p104 = scmp.eq.s32.totalorder %s24, 0
      %p105 = por %p103, %p104
      %s107 = sadd.s32 %s106, 1
      %p110 = scmp.eq.s32.totalorder %s18, 1
      %p111 = scmp.ne.s32.totalorder %s106, %s108
      %p112 = scmp.eq.s32.totalorder %s18, 0
      %p113 = por %p111, %p112
      %p114 = scmp.ne.s32.totalorder %s106, %s108
      %p115 = scmp.eq.s32.totalorder %s23, 1
      %p116 = por %p114, %p115
      %p117 = scmp.ne.s32.totalorder %s108, %s109
      %p118 = scmp.eq.s32.totalorder %s23, 0
      %p119 = por %p117, %p118
      %p120 = scmp.ne.s32.totalorder %s108, %s109
      %p121 = scmp.eq.s32.totalorder %s24, 1
      %p122 = por %p120, %p121
      %p124 = scmp.ne.s32.totalorder %s109, %s123
      %p125 = scmp.eq.s32.totalorder %s24, 0
      %p126 = por %p124, %p125
      %s128 = sadd.s32 %s127, 1
      %p131 = scmp.eq.s32.totalorder %s18, 1
      %p132 = scmp.ne.s32.totalorder %s127, %s129
      %p133 = scmp.eq.s32.totalorder %s18, 0
      %p134 = por %p132, %p133
      %p135 = scmp.ne.s32.totalorder %s127, %s129
      %p136 = scmp.eq.s32.totalorder %s23, 1
      %p137 = por %p135, %p136
      %p138 = scmp.ne.s32.totalorder %s129, %s130
      %p139 = scmp.eq.s32.totalorder %s23, 0
      %p140 = por %p138, %p139
      %p141 = scmp.ne.s32.totalorder %s129, %s130
      %p142 = scmp.eq.s32.totalorder %s24, 1
      %p143 = por %p141, %p142
      %p145 = scmp.ne.s32.totalorder %s130, %s144
      %p146 = scmp.eq.s32.totalorder %s24, 0
      %p147 = por %p145, %p146
      %s148 = ssub.s32 %s25, %s37
      %s149 = ssub.s32 %s26, %s33
      %s150 = sor.u32 %s148, %s149
      %p151 = scmp.eq.s32.totalorder %s150, 0
      %s153 = sadd.s32 %s152, 1
      %s154 = scalar_select %p151, %s152, %s153
      %p157 = pneg %p151
      %p158 = scmp.eq.s32.totalorder %s18, 1
      %p159 = por %p157, %p158
      %p160 = scmp.ne.s32.totalorder %s152, %s155
      %p161 = scmp.eq.s32.totalorder %s18, 0
      %p162 = por %p160, %p161
      %p163 = scmp.ne.s32.totalorder %s152, %s155
      %p164 = scmp.eq.s32.totalorder %s23, 1
      %p165 = por %p163, %p164
      %p166 = scmp.ne.s32.totalorder %s155, %s156
      %p167 = scmp.eq.s32.totalorder %s23, 0
      %p168 = por %p166, %p167
      %p169 = scmp.ne.s32.totalorder %s155, %s156
      %p170 = scmp.eq.s32.totalorder %s24, 1
      %p171 = por %p169, %p170
      %p173 = scmp.ne.s32.totalorder %s156, %s172
      %p174 = scmp.eq.s32.totalorder %s24, 0
      %p175 = por %p173, %p174
      %p176 = scmp.le.s32.totalorder 1, %s18
      %p177 = scmp.lt.s32.totalorder %s18, 3
      %p178 = pnand %p176, %p177
      %p179 = pneg %p178
      // Predicated region
      $region9: #{tpu_custom_call.1} parent=5 // pred_check
        _
      $region10: #{tpu_custom_call.1} parent=5 // pred_check_branch
        %181 = sbr.rel (%p178) target = $region12
      $region11: #{tpu_custom_call.1} parent=5 // pred_region
        %s182 = ssub.s32 %s18, 1
        // Predicated region
        $region13: #{tpu_custom_call.1} parent=11 // pred_check
          %p183 = pneg %p77
        $region14: #{tpu_custom_call.1} parent=11 // pred_check_branch
          %185 = sbr.rel (%p183) target = $region16
        $region15: #{tpu_custom_call.1} parent=11 // pred_region
          _
        $region16: #{tpu_custom_call.1} parent=11 // pred_fallthru
          _
        // Predicated region
        $region17: #{tpu_custom_call.1} parent=11 // pred_check
          %p186 = pneg %p98
        $region18: #{tpu_custom_call.1} parent=11 // pred_check_branch
          %188 = sbr.rel (%p186) target = $region20
        $region19: #{tpu_custom_call.1} parent=11 // pred_region
          _
        $region20: #{tpu_custom_call.1} parent=11 // pred_fallthru
          _
        // Predicated region
        $region21: #{tpu_custom_call.1} parent=11 // pred_check
          %p189 = pneg %p119
        $region22: #{tpu_custom_call.1} parent=11 // pred_check_branch
          %191 = sbr.rel (%p189) target = $region24
        $region23: #{tpu_custom_call.1} parent=11 // pred_region
          %s193 = ssub.s32 1024, 1024
          %194 = vsyncadd [#allocation7], %s193
          %s195 = sshll.u32 [#allocation6], 4
          %s196 = int_to_ptr.vmem [resolvable:$true] %s195
          %201 = dma.hbm_to_vmem [thread:$0]  %s3, 1024, %s196, [#allocation7], 64, 64, 4
        $region24: #{tpu_custom_call.1} parent=11 // pred_fallthru
          _
        // Predicated region
        $region25: #{tpu_custom_call.1} parent=11 // pred_check
          %p202 = pneg %p140
        $region26: #{tpu_custom_call.1} parent=11 // pred_check_branch
          %204 = sbr.rel (%p202) target = $region28
        $region27: #{tpu_custom_call.1} parent=11 // pred_region
          _
        $region28: #{tpu_custom_call.1} parent=11 // pred_fallthru
          _
      $region12: #{tpu_custom_call.1} parent=5 // pred_fallthru
        _
      %p205 = scmp.lt.s32.totalorder %s18, 2
      // Predicated region
      $region29: #{tpu_custom_call.1} parent=5 // pred_check
        %p206 = pneg %p205
      $region30: #{tpu_custom_call.1} parent=5 // pred_check_branch
        %208 = sbr.rel (%p206) target = $region32
      $region31: #{tpu_custom_call.1} parent=5 // pred_region
        // Predicated region
        $region33: #{tpu_custom_call.1} parent=31 // pred_check
          %p209 = pneg %p50
        $region34: #{tpu_custom_call.1} parent=31 // pred_check_branch
          %211 = sbr.rel (%p209) target = $region36
        $region35: #{tpu_custom_call.1} parent=31 // pred_region
          %s212 = sand.u32 %s40, 1
          %s213 = scalar_lea.sflag [#allocation4], %s212
          %s214 = sand.u32 %s40, 1
          %s215 = smul.addr %s214, 136
          %s216 = scalar_lea.vmem [#allocation3], %s215
          %s218 = ssub.s32 2176, 2176
          %219 = vsyncadd %s213, %s218
          %s220 = smul.addr %s25, 34
          %s221 = smul.addr %s220, 64
          %s222 = scalar_lea.hbm %s0, %s221
          %s223 = sshll.u32 %s216, 4
          %s224 = int_to_ptr.vmem [resolvable:$true] %s223
          %229 = dma.hbm_to_vmem [thread:$0]  %s222, 2176, %s224, %s213, 64, 64, 4
        $region36: #{tpu_custom_call.1} parent=31 // pred_fallthru
          _
      $region32: #{tpu_custom_call.1} parent=5 // pred_fallthru
        _
      %p230 = scmp.le.s32.totalorder 1, %s18
      %p231 = scmp.lt.s32.totalorder %s18, 3
      %p232 = pnand %p230, %p231
      %p233 = pneg %p232
      // Predicated region
      $region37: #{tpu_custom_call.1} parent=5 // pred_check
        _
      $region38: #{tpu_custom_call.1} parent=5 // pred_check_branch
        %235 = sbr.rel (%p232) target = $region40
      $region39: #{tpu_custom_call.1} parent=5 // pred_region
        %s236 = ssub.s32 %s18, 1
        %s237 = sand.u32 %s43, 1
        %s238 = scalar_lea.sflag [#allocation4], %s237
        %s239 = sand.u32 %s43, 1
        %s240 = smul.addr %s239, 136
        %s241 = scalar_lea.vmem [#allocation3], %s240
        // Predicated region
        $region41: #{tpu_custom_call.1} parent=39 // pred_check
          %p242 = pneg %p56
        $region42: #{tpu_custom_call.1} parent=39 // pred_check_branch
          %244 = sbr.rel (%p242) target = $region44
        $region43: #{tpu_custom_call.1} parent=39 // pred_region
          %245 = dma.done %s238, 2176
        $region44: #{tpu_custom_call.1} parent=39 // pred_fallthru
          _
        // Predicated region
        $region45: #{tpu_custom_call.1} parent=39 // pred_check
          %p246 = pneg %p119
        $region46: #{tpu_custom_call.1} parent=39 // pred_check_branch
          %248 = sbr.rel (%p246) target = $region48
        $region47: #{tpu_custom_call.1} parent=39 // pred_region
          %249 = dma.done [#allocation7], 1024
        $region48: #{tpu_custom_call.1} parent=39 // pred_fallthru
          _
        %s250 = sand.u32 %s43, 1
        %s251 = scalar_lea.sflag [#allocation4], %s250
        %s252 = sand.u32 %s43, 1
        %s253 = smul.addr %s252, 136
        %s254 = scalar_lea.vmem [#allocation3], %s253
        %p255 = pneg %p56
        %p256 = pneg %p53
        %p257 = pneg %p77
        %p258 = pneg %p74
        %p259 = pneg %p98
        %p260 = pneg %p95
        %p261 = pneg %p119
        %p262 = pneg %p116
        %p263 = pneg %p140
        %p264 = pneg %p137
        %p265 = pneg %p168
        %p266 = pneg %p165
        %s267 = sand.u32 %s155, 1
        %s268 = scalar_lea.sflag [#allocation5], %s267
        %s269 = sand.u32 %s155, 1
        %s270 = smul.addr %s269, 128
        %s271 = scalar_lea.vmem [#allocation8], %s270
        %s272 = smul.u32 32, %s28
        %s274 = smul.u32 %s28, 256
        %s275 = sshra.s32 %s274, 3
        %s276 = sand.u32 %s274, 7
        %s277 = smul.addr %s275, 4
        %s278 = scalar_lea.vmem %s241, %s277 [#allocation3]
        %v279 = vld [vmem:[%s278] sm:$0xf]
        %v280 = vld [vmem:[%s278 + $0x4] sm:$0xf]
        %v281 = vld [vmem:[%s278 + $0x8] sm:$0xf]
        %v282 = vld [vmem:[%s278 + $0xc] sm:$0xf]
        %v283 = vld [vmem:[%s278 + $0x10] sm:$0xf]
        %v284 = vld [vmem:[%s278 + $0x14] sm:$0xf]
        %v285 = vld [vmem:[%s278 + $0x18] sm:$0xf]
        %v286 = vld [vmem:[%s278 + $0x1c] sm:$0xf]
        %v287 = vld [vmem:[%s278 + $0x20] sm:$0xf]
        %v288 = vld [vmem:[%s278 + $0x24] sm:$0xf]
        %v289 = vld [vmem:[%s278 + $0x28] sm:$0xf]
        %v290 = vld [vmem:[%s278 + $0x2c] sm:$0xf]
        %v291 = vld [vmem:[%s278 + $0x30] sm:$0xf]
        %v292 = vld [vmem:[%s278 + $0x34] sm:$0xf]
        %v293 = vld [vmem:[%s278 + $0x38] sm:$0xf]
        %v294 = vld [vmem:[%s278 + $0x3c] sm:$0xf]
        %v295 = vld [vmem:[%s278 + $0x40] sm:$0xf]
        %v296 = vld [vmem:[%s278 + $0x44] sm:$0xf]
        %v297 = vld [vmem:[%s278 + $0x48] sm:$0xf]
        %v298 = vld [vmem:[%s278 + $0x4c] sm:$0xf]
        %v299 = vld [vmem:[%s278 + $0x50] sm:$0xf]
        %v300 = vld [vmem:[%s278 + $0x54] sm:$0xf]
        %v301 = vld [vmem:[%s278 + $0x58] sm:$0xf]
        %v302 = vld [vmem:[%s278 + $0x5c] sm:$0xf]
        %v303 = vld [vmem:[%s278 + $0x60] sm:$0xf]
        %v304 = vld [vmem:[%s278 + $0x64] sm:$0xf]
        %v305 = vld [vmem:[%s278 + $0x68] sm:$0xf]
        %v306 = vld [vmem:[%s278 + $0x6c] sm:$0xf]
        %v307 = vld [vmem:[%s278 + $0x70] sm:$0xf]
        %v308 = vld [vmem:[%s278 + $0x74] sm:$0xf]
        %v309 = vld [vmem:[%s278 + $0x78] sm:$0xf]
        %v310 = vld [vmem:[%s278 + $0x7c] sm:$0xf]
        %v311 = vld [vmem:[%s278 + $0x80] sm:$0xf]
        %v312 = vld [vmem:[%s278 + $0x84] sm:$0xf]
        %v313 = vunpack.c.l.bf16 %v279
        %v314 = vunpack.c.l.bf16 %v280
        %v315 = vunpack.c.l.bf16 %v281
        %v316 = vunpack.c.l.bf16 %v282
        %v317 = vunpack.c.l.bf16 %v283
        %v318 = vunpack.c.l.bf16 %v284
        %v319 = vunpack.c.l.bf16 %v285
        %v320 = vunpack.c.l.bf16 %v286
        %v321 = vunpack.c.l.bf16 %v287
        %v322 = vunpack.c.l.bf16 %v288
        %v323 = vunpack.c.l.bf16 %v289
        %v324 = vunpack.c.l.bf16 %v290
        %v325 = vunpack.c.l.bf16 %v291
        %v326 = vunpack.c.l.bf16 %v292
        %v327 = vunpack.c.l.bf16 %v293
        %v328 = vunpack.c.l.bf16 %v294
        %v329 = vunpack.c.l.bf16 %v295
        %v330 = vunpack.c.l.bf16 %v296
        %v331 = vunpack.c.l.bf16 %v297
        %v332 = vunpack.c.l.bf16 %v298
        %v333 = vunpack.c.l.bf16 %v299
        %v334 = vunpack.c.l.bf16 %v300
        %v335 = vunpack.c.l.bf16 %v301
        %v336 = vunpack.c.l.bf16 %v302
        %v337 = vunpack.c.l.bf16 %v303
        %v338 = vunpack.c.l.bf16 %v304
        %v339 = vunpack.c.l.bf16 %v305
        %v340 = vunpack.c.l.bf16 %v306
        %v341 = vunpack.c.l.bf16 %v307
        %v342 = vunpack.c.l.bf16 %v308
        %v343 = vunpack.c.l.bf16 %v309
        %v344 = vunpack.c.l.bf16 %v310
        %v345 = vunpack.c.l.bf16 %v311
        %v346 = vunpack.c.l.bf16 %v312
        %347 = vst [vmem:[#allocation2] sm:$0xff] %v313
        %348 = vst [vmem:[#allocation2 + $0x8] sm:$0xff] %v314
        %349 = vst [vmem:[#allocation2 + $0x10] sm:$0xff] %v315
        %350 = vst [vmem:[#allocation2 + $0x18] sm:$0xff] %v316
        %351 = vst [vmem:[#allocation2 + $0x20] sm:$0xff] %v317
        %352 = vst [vmem:[#allocation2 + $0x28] sm:$0xff] %v318
        %353 = vst [vmem:[#allocation2 + $0x30] sm:$0xff] %v319
        %354 = vst [vmem:[#allocation2 + $0x38] sm:$0xff] %v320
        %355 = vst [vmem:[#allocation2 + $0x40] sm:$0xff] %v321
        %356 = vst [vmem:[#allocation2 + $0x48] sm:$0xff] %v322
        %357 = vst [vmem:[#allocation2 + $0x50] sm:$0xff] %v323
        %358 = vst [vmem:[#allocation2 + $0x58] sm:$0xff] %v324
        %359 = vst [vmem:[#allocation2 + $0x60] sm:$0xff] %v325
        %360 = vst [vmem:[#allocation2 + $0x68] sm:$0xff] %v326
        %361 = vst [vmem:[#allocation2 + $0x70] sm:$0xff] %v327
        %362 = vst [vmem:[#allocation2 + $0x78] sm:$0xff] %v328
        %363 = vst [vmem:[#allocation2 + $0x80] sm:$0xff] %v329
        %364 = vst [vmem:[#allocation2 + $0x88] sm:$0xff] %v330
        %365 = vst [vmem:[#allocation2 + $0x90] sm:$0xff] %v331
        %366 = vst [vmem:[#allocation2 + $0x98] sm:$0xff] %v332
        %367 = vst [vmem:[#allocation2 + $0xa0] sm:$0xff] %v333
        %368 = vst [vmem:[#allocation2 + $0xa8] sm:$0xff] %v334
        %369 = vst [vmem:[#allocation2 + $0xb0] sm:$0xff] %v335
        %370 = vst [vmem:[#allocation2 + $0xb8] sm:$0xff] %v336
        %371 = vst [vmem:[#allocation2 + $0xc0] sm:$0xff] %v337
        %372 = vst [vmem:[#allocation2 + $0xc8] sm:$0xff] %v338
        %373 = vst [vmem:[#allocation2 + $0xd0] sm:$0xff] %v339
        %374 = vst [vmem:[#allocation2 + $0xd8] sm:$0xff] %v340
        %375 = vst [vmem:[#allocation2 + $0xe0] sm:$0xff] %v341
        %376 = vst [vmem:[#allocation2 + $0xe8] sm:$0xff] %v342
        %377 = vst [vmem:[#allocation2 + $0xf0] sm:$0xff] %v343
        %378 = vst [vmem:[#allocation2 + $0xf8] sm:$0xff] %v344
        %379 = vst [vmem:[#allocation2 + $0x100] sm:$0xff] %v345
        %380 = vst [vmem:[#allocation2 + $0x108] sm:$0xff] %v346
        %v381 = vld [vmem:[%s1] sm:$0x1]
        %v382 = vld [vmem:[%s1 + $0x1] sm:$0x1]
        %v383 = vld [vmem:[%s1 + $0x2] sm:$0x1]
        %v384 = vld [vmem:[#allocation2] sm:$0xff]
        %v385 = vld [vmem:[#allocation2 + $0x8] sm:$0xff]
        %v386 = vld [vmem:[#allocation2 + $0x10] sm:$0xff]
        %v387 = vld [vmem:[#allocation2 + $0x18] sm:$0xff]
        %v388 = vld [vmem:[#allocation2 + $0x20] sm:$0xff]
        %v389 = vld [vmem:[#allocation2 + $0x28] sm:$0xff]
        %v390 = vld [vmem:[#allocation2 + $0x30] sm:$0xff]
        %v391 = vld [vmem:[#allocation2 + $0x38] sm:$0xff]
        %v392 = vld [vmem:[#allocation2 + $0x40] sm:$0xff]
        %v393 = vld [vmem:[#allocation2 + $0x48] sm:$0xff]
        %v394 = vld [vmem:[#allocation2 + $0x50] sm:$0xff]
        %v395 = vld [vmem:[#allocation2 + $0x58] sm:$0xff]
        %v396 = vld [vmem:[#allocation2 + $0x60] sm:$0xff]
        %v397 = vld [vmem:[#allocation2 + $0x68] sm:$0xff]
        %v398 = vld [vmem:[#allocation2 + $0x70] sm:$0xff]
        %v399 = vld [vmem:[#allocation2 + $0x78] sm:$0xff]
        %v400 = vld [vmem:[#allocation2 + $0x80] sm:$0xff]
        %v401 = vld [vmem:[#allocation2 + $0x88] sm:$0xff]
        %v402 = vld [vmem:[#allocation2 + $0x90] sm:$0xff]
        %v403 = vld [vmem:[#allocation2 + $0x98] sm:$0xff]
        %v404 = vld [vmem:[#allocation2 + $0xa0] sm:$0xff]
        %v405 = vld [vmem:[#allocation2 + $0xa8] sm:$0xff]
        %v406 = vld [vmem:[#allocation2 + $0xb0] sm:$0xff]
        %v407 = vld [vmem:[#allocation2 + $0xb8] sm:$0xff]
        %v408 = vld [vmem:[#allocation2 + $0xc0] sm:$0xff]
        %v409 = vld [vmem:[#allocation2 + $0xc8] sm:$0xff]
        %v410 = vld [vmem:[#allocation2 + $0xd0] sm:$0xff]
        %v411 = vld [vmem:[#allocation2 + $0xd8] sm:$0xff]
        %v412 = vld [vmem:[#allocation2 + $0xe0] sm:$0xff]
        %v413 = vld [vmem:[#allocation2 + $0xe8] sm:$0xff]
        %v414 = vld [vmem:[#allocation2 + $0xf0] sm:$0xff]
        %v415 = vld [vmem:[#allocation2 + $0xf8] sm:$0xff]
        %v417 = vlaneseq
        %v418 = vshrl.u32 %v417, 7
        %v419 = vsub.s32 0, %v418
        %v420 = vrot.slane %v381, %v419
        %v422 = vmul.f32 %v384, %v420
        %v423 = vmul.f32 %v385, %v420
        %v424 = vmul.f32 %v386, %v420
        %v425 = vmul.f32 %v387, %v420
        %v426 = vmul.f32 %v388, %v420
        %v427 = vmul.f32 %v389, %v420
        %v428 = vmul.f32 %v390, %v420
        %v429 = vmul.f32 %v391, %v420
        %v430 = vmul.f32 %v392, %v420
        %v431 = vmul.f32 %v393, %v420
        %v432 = vmul.f32 %v394, %v420
        %v433 = vmul.f32 %v395, %v420
        %v434 = vmul.f32 %v396, %v420
        %v435 = vmul.f32 %v397, %v420
        %v436 = vmul.f32 %v398, %v420
        %v437 = vmul.f32 %v399, %v420
        %v438 = vmul.f32 %v400, %v420
        %v439 = vmul.f32 %v401, %v420
        %v440 = vmul.f32 %v402, %v420
        %v441 = vmul.f32 %v403, %v420
        %v442 = vmul.f32 %v404, %v420
        %v443 = vmul.f32 %v405, %v420
        %v444 = vmul.f32 %v406, %v420
        %v445 = vmul.f32 %v407, %v420
        %v446 = vmul.f32 %v408, %v420
        %v447 = vmul.f32 %v409, %v420
        %v448 = vmul.f32 %v410, %v420
        %v449 = vmul.f32 %v411, %v420
        %v450 = vmul.f32 %v412, %v420
        %v451 = vmul.f32 %v413, %v420
        %v452 = vmul.f32 %v414, %v420
        %v453 = vmul.f32 %v415, %v420
        %v454 = vld [vmem:[#allocation2 + $0x1] sm:$0xff]
        %v455 = vld [vmem:[#allocation2 + $0x9] sm:$0xff]
        %v456 = vld [vmem:[#allocation2 + $0x11] sm:$0xff]
        %v457 = vld [vmem:[#allocation2 + $0x19] sm:$0xff]
        %v458 = vld [vmem:[#allocation2 + $0x21] sm:$0xff]
        %v459 = vld [vmem:[#allocation2 + $0x29] sm:$0xff]
        %v460 = vld [vmem:[#allocation2 + $0x31] sm:$0xff]
        %v461 = vld [vmem:[#allocation2 + $0x39] sm:$0xff]
        %v462 = vld [vmem:[#allocation2 + $0x41] sm:$0xff]
        %v463 = vld [vmem:[#allocation2 + $0x49] sm:$0xff]
        %v464 = vld [vmem:[#allocation2 + $0x51] sm:$0xff]
        %v465 = vld [vmem:[#allocation2 + $0x59] sm:$0xff]
        %v466 = vld [vmem:[#allocation2 + $0x61] sm:$0xff]
        %v467 = vld [vmem:[#allocation2 + $0x69] sm:$0xff]
        %v468 = vld [vmem:[#allocation2 + $0x71] sm:$0xff]
        %v469 = vld [vmem:[#allocation2 + $0x79] sm:$0xff]
        %v470 = vld [vmem:[#allocation2 + $0x81] sm:$0xff]
        %v471 = vld [vmem:[#allocation2 + $0x89] sm:$0xff]
        %v472 = vld [vmem:[#allocation2 + $0x91] sm:$0xff]
        %v473 = vld [vmem:[#allocation2 + $0x99] sm:$0xff]
        %v474 = vld [vmem:[#allocation2 + $0xa1] sm:$0xff]
        %v475 = vld [vmem:[#allocation2 + $0xa9] sm:$0xff]
        %v476 = vld [vmem:[#allocation2 + $0xb1] sm:$0xff]
        %v477 = vld [vmem:[#allocation2 + $0xb9] sm:$0xff]
        %v478 = vld [vmem:[#allocation2 + $0xc1] sm:$0xff]
        %v479 = vld [vmem:[#allocation2 + $0xc9] sm:$0xff]
        %v480 = vld [vmem:[#allocation2 + $0xd1] sm:$0xff]
        %v481 = vld [vmem:[#allocation2 + $0xd9] sm:$0xff]
        %v482 = vld [vmem:[#allocation2 + $0xe1] sm:$0xff]
        %v483 = vld [vmem:[#allocation2 + $0xe9] sm:$0xff]
        %v484 = vld [vmem:[#allocation2 + $0xf1] sm:$0xff]
        %v485 = vld [vmem:[#allocation2 + $0xf9] sm:$0xff]
        %v487 = vlaneseq
        %v488 = vshrl.u32 %v487, 7
        %v489 = vsub.s32 0, %v488
        %v490 = vrot.slane %v382, %v489
        %v492 = vmul.f32 %v454, %v490
        %v493 = vmul.f32 %v455, %v490
        %v494 = vmul.f32 %v456, %v490
        %v495 = vmul.f32 %v457, %v490
        %v496 = vmul.f32 %v458, %v490
        %v497 = vmul.f32 %v459, %v490
        %v498 = vmul.f32 %v460, %v490
        %v499 = vmul.f32 %v461, %v490
        %v500 = vmul.f32 %v462, %v490
        %v501 = vmul.f32 %v463, %v490
        %v502 = vmul.f32 %v464, %v490
        %v503 = vmul.f32 %v465, %v490
        %v504 = vmul.f32 %v466, %v490
        %v505 = vmul.f32 %v467, %v490
        %v506 = vmul.f32 %v468, %v490
        %v507 = vmul.f32 %v469, %v490
        %v508 = vmul.f32 %v470, %v490
        %v509 = vmul.f32 %v471, %v490
        %v510 = vmul.f32 %v472, %v490
        %v511 = vmul.f32 %v473, %v490
        %v512 = vmul.f32 %v474, %v490
        %v513 = vmul.f32 %v475, %v490
        %v514 = vmul.f32 %v476, %v490
        %v515 = vmul.f32 %v477, %v490
        %v516 = vmul.f32 %v478, %v490
        %v517 = vmul.f32 %v479, %v490
        %v518 = vmul.f32 %v480, %v490
        %v519 = vmul.f32 %v481, %v490
        %v520 = vmul.f32 %v482, %v490
        %v521 = vmul.f32 %v483, %v490
        %v522 = vmul.f32 %v484, %v490
        %v523 = vmul.f32 %v485, %v490
        %v524 = vadd.f32 %v422, %v492
        %v525 = vadd.f32 %v423, %v493
        %v526 = vadd.f32 %v424, %v494
        %v527 = vadd.f32 %v425, %v495
        %v528 = vadd.f32 %v426, %v496
        %v529 = vadd.f32 %v427, %v497
        %v530 = vadd.f32 %v428, %v498
        %v531 = vadd.f32 %v429, %v499
        %v532 = vadd.f32 %v430, %v500
        %v533 = vadd.f32 %v431, %v501
        %v534 = vadd.f32 %v432, %v502
        %v535 = vadd.f32 %v433, %v503
        %v536 = vadd.f32 %v434, %v504
        %v537 = vadd.f32 %v435, %v505
        %v538 = vadd.f32 %v436, %v506
        %v539 = vadd.f32 %v437, %v507
        %v540 = vadd.f32 %v438, %v508
        %v541 = vadd.f32 %v439, %v509
        %v542 = vadd.f32 %v440, %v510
        %v543 = vadd.f32 %v441, %v511
        %v544 = vadd.f32 %v442, %v512
        %v545 = vadd.f32 %v443, %v513
        %v546 = vadd.f32 %v444, %v514
        %v547 = vadd.f32 %v445, %v515
        %v548 = vadd.f32 %v446, %v516
        %v549 = vadd.f32 %v447, %v517
        %v550 = vadd.f32 %v448, %v518
        %v551 = vadd.f32 %v449, %v519
        %v552 = vadd.f32 %v450, %v520
        %v553 = vadd.f32 %v451, %v521
        %v554 = vadd.f32 %v452, %v522
        %v555 = vadd.f32 %v453, %v523
        %v556 = vld [vmem:[#allocation2 + $0x2] sm:$0xff]
        %v557 = vld [vmem:[#allocation2 + $0xa] sm:$0xff]
        %v558 = vld [vmem:[#allocation2 + $0x12] sm:$0xff]
        %v559 = vld [vmem:[#allocation2 + $0x1a] sm:$0xff]
        %v560 = vld [vmem:[#allocation2 + $0x22] sm:$0xff]
        %v561 = vld [vmem:[#allocation2 + $0x2a] sm:$0xff]
        %v562 = vld [vmem:[#allocation2 + $0x32] sm:$0xff]
        %v563 = vld [vmem:[#allocation2 + $0x3a] sm:$0xff]
        %v564 = vld [vmem:[#allocation2 + $0x42] sm:$0xff]
        %v565 = vld [vmem:[#allocation2 + $0x4a] sm:$0xff]
        %v566 = vld [vmem:[#allocation2 + $0x52] sm:$0xff]
        %v567 = vld [vmem:[#allocation2 + $0x5a] sm:$0xff]
        %v568 = vld [vmem:[#allocation2 + $0x62] sm:$0xff]
        %v569 = vld [vmem:[#allocation2 + $0x6a] sm:$0xff]
        %v570 = vld [vmem:[#allocation2 + $0x72] sm:$0xff]
        %v571 = vld [vmem:[#allocation2 + $0x7a] sm:$0xff]
        %v572 = vld [vmem:[#allocation2 + $0x82] sm:$0xff]
        %v573 = vld [vmem:[#allocation2 + $0x8a] sm:$0xff]
        %v574 = vld [vmem:[#allocation2 + $0x92] sm:$0xff]
        %v575 = vld [vmem:[#allocation2 + $0x9a] sm:$0xff]
        %v576 = vld [vmem:[#allocation2 + $0xa2] sm:$0xff]
        %v577 = vld [vmem:[#allocation2 + $0xaa] sm:$0xff]
        %v578 = vld [vmem:[#allocation2 + $0xb2] sm:$0xff]
        %v579 = vld [vmem:[#allocation2 + $0xba] sm:$0xff]
        %v580 = vld [vmem:[#allocation2 + $0xc2] sm:$0xff]
        %v581 = vld [vmem:[#allocation2 + $0xca] sm:$0xff]
        %v582 = vld [vmem:[#allocation2 + $0xd2] sm:$0xff]
        %v583 = vld [vmem:[#allocation2 + $0xda] sm:$0xff]
        %v584 = vld [vmem:[#allocation2 + $0xe2] sm:$0xff]
        %v585 = vld [vmem:[#allocation2 + $0xea] sm:$0xff]
        %v586 = vld [vmem:[#allocation2 + $0xf2] sm:$0xff]
        %v587 = vld [vmem:[#allocation2 + $0xfa] sm:$0xff]
        %v589 = vlaneseq
        %v590 = vshrl.u32 %v589, 7
        %v591 = vsub.s32 0, %v590
        %v592 = vrot.slane %v383, %v591
        %v594 = vmul.f32 %v556, %v592
        %v595 = vmul.f32 %v557, %v592
        %v596 = vmul.f32 %v558, %v592
        %v597 = vmul.f32 %v559, %v592
        %v598 = vmul.f32 %v560, %v592
        %v599 = vmul.f32 %v561, %v592
        %v600 = vmul.f32 %v562, %v592
        %v601 = vmul.f32 %v563, %v592
        %v602 = vmul.f32 %v564, %v592
        %v603 = vmul.f32 %v565, %v592
        %v604 = vmul.f32 %v566, %v592
        %v605 = vmul.f32 %v567, %v592
        %v606 = vmul.f32 %v568, %v592
        %v607 = vmul.f32 %v569, %v592
        %v608 = vmul.f32 %v570, %v592
        %v609 = vmul.f32 %v571, %v592
        %v610 = vmul.f32 %v572, %v592
        %v611 = vmul.f32 %v573, %v592
        %v612 = vmul.f32 %v574, %v592
        %v613 = vmul.f32 %v575, %v592
        %v614 = vmul.f32 %v576, %v592
        %v615 = vmul.f32 %v577, %v592
        %v616 = vmul.f32 %v578, %v592
        %v617 = vmul.f32 %v579, %v592
        %v618 = vmul.f32 %v580, %v592
        %v619 = vmul.f32 %v581, %v592
        %v620 = vmul.f32 %v582, %v592
        %v621 = vmul.f32 %v583, %v592
        %v622 = vmul.f32 %v584, %v592
        %v623 = vmul.f32 %v585, %v592
        %v624 = vmul.f32 %v586, %v592
        %v625 = vmul.f32 %v587, %v592
        %v626 = vadd.f32 %v524, %v594
        %v627 = vadd.f32 %v525, %v595
        %v628 = vadd.f32 %v526, %v596
        %v629 = vadd.f32 %v527, %v597
        %v630 = vadd.f32 %v528, %v598
        %v631 = vadd.f32 %v529, %v599
        %v632 = vadd.f32 %v530, %v600
        %v633 = vadd.f32 %v531, %v601
        %v634 = vadd.f32 %v532, %v602
        %v635 = vadd.f32 %v533, %v603
        %v636 = vadd.f32 %v534, %v604
        %v637 = vadd.f32 %v535, %v605
        %v638 = vadd.f32 %v536, %v606
        %v639 = vadd.f32 %v537, %v607
        %v640 = vadd.f32 %v538, %v608
        %v641 = vadd.f32 %v539, %v609
        %v642 = vadd.f32 %v540, %v610
        %v643 = vadd.f32 %v541, %v611
        %v644 = vadd.f32 %v542, %v612
        %v645 = vadd.f32 %v543, %v613
        %v646 = vadd.f32 %v544, %v614
        %v647 = vadd.f32 %v545, %v615
        %v648 = vadd.f32 %v546, %v616
        %v649 = vadd.f32 %v547, %v617
        %v650 = vadd.f32 %v548, %v618
        %v651 = vadd.f32 %v549, %v619
        %v652 = vadd.f32 %v550, %v620
        %v653 = vadd.f32 %v551, %v621
        %v654 = vadd.f32 %v552, %v622
        %v655 = vadd.f32 %v553, %v623
        %v656 = vadd.f32 %v554, %v624
        %v657 = vadd.f32 %v555, %v625
        %v658 = vld [vmem:[%s2] sm:$0x1]
        %v660 = vlaneseq
        %v661 = vshrl.u32 %v660, 7
        %v662 = vsub.s32 0, %v661
        %v663 = vrot.slane %v658, %v662
        %v665 = vadd.f32 %v626, %v663
        %v666 = vadd.f32 %v627, %v663
        %v667 = vadd.f32 %v628, %v663
        %v668 = vadd.f32 %v629, %v663
        %v669 = vadd.f32 %v630, %v663
        %v670 = vadd.f32 %v631, %v663
        %v671 = vadd.f32 %v632, %v663
        %v672 = vadd.f32 %v633, %v663
        %v673 = vadd.f32 %v634, %v663
        %v674 = vadd.f32 %v635, %v663
        %v675 = vadd.f32 %v636, %v663
        %v676 = vadd.f32 %v637, %v663
        %v677 = vadd.f32 %v638, %v663
        %v678 = vadd.f32 %v639, %v663
        %v679 = vadd.f32 %v640, %v663
        %v680 = vadd.f32 %v641, %v663
        %v681 = vadd.f32 %v642, %v663
        %v682 = vadd.f32 %v643, %v663
        %v683 = vadd.f32 %v644, %v663
        %v684 = vadd.f32 %v645, %v663
        %v685 = vadd.f32 %v646, %v663
        %v686 = vadd.f32 %v647, %v663
        %v687 = vadd.f32 %v648, %v663
        %v688 = vadd.f32 %v649, %v663
        %v689 = vadd.f32 %v650, %v663
        %v690 = vadd.f32 %v651, %v663
        %v691 = vadd.f32 %v652, %v663
        %v692 = vadd.f32 %v653, %v663
        %v693 = vadd.f32 %v654, %v663
        %v694 = vadd.f32 %v655, %v663
        %v695 = vadd.f32 %v656, %v663
        %v696 = vadd.f32 %v657, %v663
        %v697 = vmax.f32 %v665, 0.0
        %v698 = vmax.f32 %v666, 0.0
        %v699 = vmax.f32 %v667, 0.0
        %v700 = vmax.f32 %v668, 0.0
        %v701 = vmax.f32 %v669, 0.0
        %v702 = vmax.f32 %v670, 0.0
        %v703 = vmax.f32 %v671, 0.0
        %v704 = vmax.f32 %v672, 0.0
        %v705 = vmax.f32 %v673, 0.0
        %v706 = vmax.f32 %v674, 0.0
        %v707 = vmax.f32 %v675, 0.0
        %v708 = vmax.f32 %v676, 0.0
        %v709 = vmax.f32 %v677, 0.0
        %v710 = vmax.f32 %v678, 0.0
        %v711 = vmax.f32 %v679, 0.0
        %v712 = vmax.f32 %v680, 0.0
        %v713 = vmax.f32 %v681, 0.0
        %v714 = vmax.f32 %v682, 0.0
        %v715 = vmax.f32 %v683, 0.0
        %v716 = vmax.f32 %v684, 0.0
        %v717 = vmax.f32 %v685, 0.0
        %v718 = vmax.f32 %v686, 0.0
        %v719 = vmax.f32 %v687, 0.0
        %v720 = vmax.f32 %v688, 0.0
        %v721 = vmax.f32 %v689, 0.0
        %v722 = vmax.f32 %v690, 0.0
        %v723 = vmax.f32 %v691, 0.0
        %v724 = vmax.f32 %v692, 0.0
        %v725 = vmax.f32 %v693, 0.0
        %v726 = vmax.f32 %v694, 0.0
        %v727 = vmax.f32 %v695, 0.0
        %v728 = vmax.f32 %v696, 0.0
        %v729 = vmin.f32 %v697, 6.0
        %v730 = vmin.f32 %v698, 6.0
        %v731 = vmin.f32 %v699, 6.0
        %v732 = vmin.f32 %v700, 6.0
        %v733 = vmin.f32 %v701, 6.0
        %v734 = vmin.f32 %v702, 6.0
        %v735 = vmin.f32 %v703, 6.0
        %v736 = vmin.f32 %v704, 6.0
        %v737 = vmin.f32 %v705, 6.0
        %v738 = vmin.f32 %v706, 6.0
        %v739 = vmin.f32 %v707, 6.0
        %v740 = vmin.f32 %v708, 6.0
        %v741 = vmin.f32 %v709, 6.0
        %v742 = vmin.f32 %v710, 6.0
        %v743 = vmin.f32 %v711, 6.0
        %v744 = vmin.f32 %v712, 6.0
        %v745 = vmin.f32 %v713, 6.0
        %v746 = vmin.f32 %v714, 6.0
        %v747 = vmin.f32 %v715, 6.0
        %v748 = vmin.f32 %v716, 6.0
        %v749 = vmin.f32 %v717, 6.0
        %v750 = vmin.f32 %v718, 6.0
        %v751 = vmin.f32 %v719, 6.0
        %v752 = vmin.f32 %v720, 6.0
        %v753 = vmin.f32 %v721, 6.0
        %v754 = vmin.f32 %v722, 6.0
        %v755 = vmin.f32 %v723, 6.0
        %v756 = vmin.f32 %v724, 6.0
        %v757 = vmin.f32 %v725, 6.0
        %v758 = vmin.f32 %v726, 6.0
        %v759 = vmin.f32 %v727, 6.0
        %v760 = vmin.f32 %v728, 6.0
        %v761 = vpack.c.bf16 %v730, %v729
        %v762 = vpack.c.bf16 %v732, %v731
        %v763 = vpack.c.bf16 %v734, %v733
        %v764 = vpack.c.bf16 %v736, %v735
        %v765 = vpack.c.bf16 %v738, %v737
        %v766 = vpack.c.bf16 %v740, %v739
        %v767 = vpack.c.bf16 %v742, %v741
        %v768 = vpack.c.bf16 %v744, %v743
        %v769 = vpack.c.bf16 %v746, %v745
        %v770 = vpack.c.bf16 %v748, %v747
        %v771 = vpack.c.bf16 %v750, %v749
        %v772 = vpack.c.bf16 %v752, %v751
        %v773 = vpack.c.bf16 %v754, %v753
        %v774 = vpack.c.bf16 %v756, %v755
        %v775 = vpack.c.bf16 %v758, %v757
        %v776 = vpack.c.bf16 %v760, %v759
        %v777 = vld [vmem:[#allocation6] sm:$0xf]
        %v778 = vld [vmem:[#allocation6 + $0x4] sm:$0xf]
        %v779 = vld [vmem:[#allocation6 + $0x8] sm:$0xf]
        %v780 = vld [vmem:[#allocation6 + $0xc] sm:$0xf]
        %v781 = vld [vmem:[#allocation6 + $0x10] sm:$0xf]
        %v782 = vld [vmem:[#allocation6 + $0x14] sm:$0xf]
        %v783 = vld [vmem:[#allocation6 + $0x18] sm:$0xf]
        %v784 = vld [vmem:[#allocation6 + $0x1c] sm:$0xf]
        %v785 = vld [vmem:[#allocation6 + $0x20] sm:$0xf]
        %v786 = vld [vmem:[#allocation6 + $0x24] sm:$0xf]
        %v787 = vld [vmem:[#allocation6 + $0x28] sm:$0xf]
        %v788 = vld [vmem:[#allocation6 + $0x2c] sm:$0xf]
        %v789 = vld [vmem:[#allocation6 + $0x30] sm:$0xf]
        %v790 = vld [vmem:[#allocation6 + $0x34] sm:$0xf]
        %v791 = vld [vmem:[#allocation6 + $0x38] sm:$0xf]
        %v792 = vld [vmem:[#allocation6 + $0x3c] sm:$0xf]
        %v793 = vld [vmem:[%s4] sm:$0x1]
        %v795 = vlaneseq
        %v796 = vshrl.u32 %v795, 7
        %v797 = vsub.s32 0, %v796
        %v798 = vrot.slane %v793, %v797
        %v816 = vunpack.c.l.b16 %v777
        %v817 = vunpack.c.l.b16 %v778
        %v818 = vunpack.c.l.b16 %v779
        %v819 = vunpack.c.l.b16 %v780
        %v820 = vunpack.c.l.b16 %v781
        %v821 = vunpack.c.l.b16 %v782
        %v822 = vunpack.c.l.b16 %v783
        %v823 = vunpack.c.l.b16 %v784
        %v824 = vunpack.c.l.b16 %v785
        %v825 = vunpack.c.l.b16 %v786
        %v826 = vunpack.c.l.b16 %v787
        %v827 = vunpack.c.l.b16 %v788
        %v828 = vunpack.c.l.b16 %v789
        %v829 = vunpack.c.l.b16 %v790
        %v830 = vunpack.c.l.b16 %v791
        %v831 = vunpack.c.l.b16 %v792
        %v832 = vpack.c.b16 %v817, %v816
        %v833 = vpack.c.b16 %v819, %v818
        %v834 = vpack.c.b16 %v821, %v820
        %v835 = vpack.c.b16 %v823, %v822
        %v836 = vpack.c.b16 %v825, %v824
        %v837 = vpack.c.b16 %v827, %v826
        %v838 = vpack.c.b16 %v829, %v828
        %v839 = vpack.c.b16 %v831, %v830
        %848 = vmatprep.subr.bf16.mxu0 0
        %849 = vmatpush1.bf16.msra.mxu0 %v832
        %850 = vmatprep.subr.bf16.mxu0 0
        %851 = vmatpush1.bf16.msra.mxu0 %v833
        %852 = vmatprep.subr.bf16.mxu0 0
        %853 = vmatpush1.bf16.msra.mxu0 %v834
        %854 = vmatprep.subr.bf16.mxu0 0
        %855 = vmatpush1.bf16.msra.mxu0 %v835
        %856 = vmatprep.subr.bf16.mxu0 0
        %857 = vmatpush1.bf16.msra.mxu0 %v836
        %858 = vmatprep.subr.bf16.mxu0 0
        %859 = vmatpush1.bf16.msra.mxu0 %v837
        %860 = vmatprep.subr.bf16.mxu0 0
        %861 = vmatpush1.bf16.msra.mxu0 %v838
        %862 = vmatprep.subr.bf16.mxu0 0
        %863 = vmatpush1.bf16.msra.mxu0 %v839
        %864 = vmatprep.subr.bf16.mxu0 0
        %865 = vmatpush1.bf16.msra.mxu0 0
        %866 = vmatprep.subr.bf16.mxu0 0
        %867 = vmatpush1.bf16.msra.mxu0 0
        %868 = vmatprep.subr.bf16.mxu0 0
        %869 = vmatpush1.bf16.msra.mxu0 0
        %870 = vmatprep.subr.bf16.mxu0 0
        %871 = vmatpush1.bf16.msra.mxu0 0
        %872 = vmatprep.subr.bf16.mxu0 0
        %873 = vmatpush1.bf16.msra.mxu0 0
        %874 = vmatprep.subr.bf16.mxu0 0
        %875 = vmatpush1.bf16.msra.mxu0 0
        %876 = vmatprep.subr.bf16.mxu0 0
        %877 = vmatpush1.bf16.msra.mxu0 0
        %878 = vmatprep.subr.bf16.mxu0 0
        %879 = vmatpush1.bf16.msra.mxu0 0
        %880 = vmatprep.mubr.bf16.mxu0 0
        %881 = vmatmul.mubr.bf16.gmra.mrb[0].mxu0 %v761
        %v882 = vpop.f32.mrb[0].mxu0
        %v883 = vadd.f32 %v798, %v882
        %v884 = vpop.f32.mrb[0].mxu0
        %v885 = vpop.f32.mrb[0].mxu0
        %v886 = vadd.f32 %v798, %v885
        %v887 = vpop.f32.mrb[0].mxu0
        %888 = vmatprep.mubr.bf16.mxu0 0
        %889 = vmatmul.mubr.bf16.gmra.mrb[0].mxu0 %v762
        %v890 = vpop.f32.mrb[0].mxu0
        %v891 = vadd.f32 %v798, %v890
        %v892 = vpop.f32.mrb[0].mxu0
        %v893 = vpop.f32.mrb[0].mxu0
        %v894 = vadd.f32 %v798, %v893
        %v895 = vpop.f32.mrb[0].mxu0
        %896 = vmatprep.mubr.bf16.mxu0 0
        %897 = vmatmul.mubr.bf16.gmra.mrb[0].mxu0 %v763
        %v898 = vpop.f32.mrb[0].mxu0
        %v899 = vadd.f32 %v798, %v898
        %v900 = vpop.f32.mrb[0].mxu0
        %v901 = vpop.f32.mrb[0].mxu0
        %v902 = vadd.f32 %v798, %v901
        %v903 = vpop.f32.mrb[0].mxu0
        %904 = vmatprep.mubr.bf16.mxu0 0
        %905 = vmatmul.mubr.bf16.gmra.mrb[0].mxu0 %v764
        %v906 = vpop.f32.mrb[0].mxu0
        %v907 = vadd.f32 %v798, %v906
        %v908 = vpop.f32.mrb[0].mxu0
        %v909 = vpop.f32.mrb[0].mxu0
        %v910 = vadd.f32 %v798, %v909
        %v911 = vpop.f32.mrb[0].mxu0
        %912 = vmatprep.mubr.bf16.mxu0 0
        %913 = vmatmul.mubr.bf16.gmra.mrb[0].mxu0 %v765
        %v914 = vpop.f32.mrb[0].mxu0
        %v915 = vadd.f32 %v798, %v914
        %v916 = vpop.f32.mrb[0].mxu0
        %v917 = vpop.f32.mrb[0].mxu0
        %v918 = vadd.f32 %v798, %v917
        %v919 = vpop.f32.mrb[0].mxu0
        %920 = vmatprep.mubr.bf16.mxu0 0
        %921 = vmatmul.mubr.bf16.gmra.mrb[0].mxu0 %v766
        %v922 = vpop.f32.mrb[0].mxu0
        %v923 = vadd.f32 %v798, %v922
        %v924 = vpop.f32.mrb[0].mxu0
        %v925 = vpop.f32.mrb[0].mxu0
        %v926 = vadd.f32 %v798, %v925
        %v927 = vpop.f32.mrb[0].mxu0
        %928 = vmatprep.mubr.bf16.mxu0 0
        %929 = vmatmul.mubr.bf16.gmra.mrb[0].mxu0 %v767
        %v930 = vpop.f32.mrb[0].mxu0
        %v931 = vadd.f32 %v798, %v930
        %v932 = vpop.f32.mrb[0].mxu0
        %v933 = vpop.f32.mrb[0].mxu0
        %v934 = vadd.f32 %v798, %v933
        %v935 = vpop.f32.mrb[0].mxu0
        %936 = vmatprep.mubr.bf16.mxu0 0
        %937 = vmatmul.mubr.bf16.gmra.mrb[0].mxu0 %v768
        %v938 = vpop.f32.mrb[0].mxu0
        %v939 = vadd.f32 %v798, %v938
        %v940 = vpop.f32.mrb[0].mxu0
        %v941 = vpop.f32.mrb[0].mxu0
        %v942 = vadd.f32 %v798, %v941
        %v943 = vpop.f32.mrb[0].mxu0
        %944 = vmatprep.mubr.bf16.mxu0 0
        %945 = vmatmul.mubr.bf16.gmra.mrb[0].mxu0 %v769
        %v946 = vpop.f32.mrb[0].mxu0
        %v947 = vadd.f32 %v798, %v946
        %v948 = vpop.f32.mrb[0].mxu0
        %v949 = vpop.f32.mrb[0].mxu0
        %v950 = vadd.f32 %v798, %v949
        %v951 = vpop.f32.mrb[0].mxu0
        %952 = vmatprep.mubr.bf16.mxu0 0
        %953 = vmatmul.mubr.bf16.gmra.mrb[0].mxu0 %v770
        %v954 = vpop.f32.mrb[0].mxu0
        %v955 = vadd.f32 %v798, %v954
        %v956 = vpop.f32.mrb[0].mxu0
        %v957 = vpop.f32.mrb[0].mxu0
        %v958 = vadd.f32 %v798, %v957
        %v959 = vpop.f32.mrb[0].mxu0
        %960 = vmatprep.mubr.bf16.mxu0 0
        %961 = vmatmul.mubr.bf16.gmra.mrb[0].mxu0 %v771
        %v962 = vpop.f32.mrb[0].mxu0
        %v963 = vadd.f32 %v798, %v962
        %v964 = vpop.f32.mrb[0].mxu0
        %v965 = vpop.f32.mrb[0].mxu0
        %v966 = vadd.f32 %v798, %v965
        %v967 = vpop.f32.mrb[0].mxu0
        %968 = vmatprep.mubr.bf16.mxu0 0
        %969 = vmatmul.mubr.bf16.gmra.mrb[0].mxu0 %v772
        %v970 = vpop.f32.mrb[0].mxu0
        %v971 = vadd.f32 %v798, %v970
        %v972 = vpop.f32.mrb[0].mxu0
        %v973 = vpop.f32.mrb[0].mxu0
        %v974 = vadd.f32 %v798, %v973
        %v975 = vpop.f32.mrb[0].mxu0
        %976 = vmatprep.mubr.bf16.mxu0 0
        %977 = vmatmul.mubr.bf16.gmra.mrb[0].mxu0 %v773
        %v978 = vpop.f32.mrb[0].mxu0
        %v979 = vadd.f32 %v798, %v978
        %v980 = vpop.f32.mrb[0].mxu0
        %v981 = vpop.f32.mrb[0].mxu0
        %v982 = vadd.f32 %v798, %v981
        %v983 = vpop.f32.mrb[0].mxu0
        %984 = vmatprep.mubr.bf16.mxu0 0
        %985 = vmatmul.mubr.bf16.gmra.mrb[0].mxu0 %v774
        %v986 = vpop.f32.mrb[0].mxu0
        %v987 = vadd.f32 %v798, %v986
        %v988 = vpop.f32.mrb[0].mxu0
        %v989 = vpop.f32.mrb[0].mxu0
        %v990 = vadd.f32 %v798, %v989
        %v991 = vpop.f32.mrb[0].mxu0
        %992 = vmatprep.mubr.bf16.mxu0 0
        %993 = vmatmul.mubr.bf16.gmra.mrb[0].mxu0 %v775
        %v994 = vpop.f32.mrb[0].mxu0
        %v995 = vadd.f32 %v798, %v994
        %v996 = vpop.f32.mrb[0].mxu0
        %v997 = vpop.f32.mrb[0].mxu0
        %v998 = vadd.f32 %v798, %v997
        %v999 = vpop.f32.mrb[0].mxu0
        %1000 = vmatprep.mubr.bf16.mxu0 0
        %1001 = vmatmul.mubr.bf16.gmra.mrb[0].mxu0 %v776
        %v1002 = vpop.f32.mrb[0].mxu0
        %v1003 = vadd.f32 %v798, %v1002
        %v1004 = vpop.f32.mrb[0].mxu0
        %v1005 = vpop.f32.mrb[0].mxu0
        %v1006 = vadd.f32 %v798, %v1005
        %v1007 = vpop.f32.mrb[0].mxu0
        %1008 = vdwg.mxu0
        %v1009 = vld [vmem:[%s278] sm:$0xf]
        %v1010 = vld [vmem:[%s278 + $0x4] sm:$0xf]
        %v1011 = vld [vmem:[%s278 + $0x8] sm:$0xf]
        %v1012 = vld [vmem:[%s278 + $0xc] sm:$0xf]
        %v1013 = vld [vmem:[%s278 + $0x10] sm:$0xf]
        %v1014 = vld [vmem:[%s278 + $0x14] sm:$0xf]
        %v1015 = vld [vmem:[%s278 + $0x18] sm:$0xf]
        %v1016 = vld [vmem:[%s278 + $0x1c] sm:$0xf]
        %v1017 = vld [vmem:[%s278 + $0x20] sm:$0xf]
        %v1018 = vld [vmem:[%s278 + $0x24] sm:$0xf]
        %v1019 = vld [vmem:[%s278 + $0x28] sm:$0xf]
        %v1020 = vld [vmem:[%s278 + $0x2c] sm:$0xf]
        %v1021 = vld [vmem:[%s278 + $0x30] sm:$0xf]
        %v1022 = vld [vmem:[%s278 + $0x34] sm:$0xf]
        %v1023 = vld [vmem:[%s278 + $0x38] sm:$0xf]
        %v1024 = vld [vmem:[%s278 + $0x3c] sm:$0xf]
        %v1025 = vld [vmem:[%s278 + $0x40] sm:$0xf]
        %v1026 = vld [vmem:[%s278 + $0x44] sm:$0xf]
        %v1027 = vld [vmem:[%s278 + $0x48] sm:$0xf]
        %v1028 = vld [vmem:[%s278 + $0x4c] sm:$0xf]
        %v1029 = vld [vmem:[%s278 + $0x50] sm:$0xf]
        %v1030 = vld [vmem:[%s278 + $0x54] sm:$0xf]
        %v1031 = vld [vmem:[%s278 + $0x58] sm:$0xf]
        %v1032 = vld [vmem:[%s278 + $0x5c] sm:$0xf]
        %v1033 = vld [vmem:[%s278 + $0x60] sm:$0xf]
        %v1034 = vld [vmem:[%s278 + $0x64] sm:$0xf]
        %v1035 = vld [vmem:[%s278 + $0x68] sm:$0xf]
        %v1036 = vld [vmem:[%s278 + $0x6c] sm:$0xf]
        %v1037 = vld [vmem:[%s278 + $0x70] sm:$0xf]
        %v1038 = vld [vmem:[%s278 + $0x74] sm:$0xf]
        %v1039 = vld [vmem:[%s278 + $0x78] sm:$0xf]
        %v1040 = vld [vmem:[%s278 + $0x7c] sm:$0xf]
        %v1041 = vld [vmem:[%s278 + $0x80] sm:$0xf]
        %v1042 = vunpack.c.l.bf16 %v1009
        %v1043 = vunpack.c.l.bf16 %v1010
        %v1044 = vunpack.c.l.bf16 %v1011
        %v1045 = vunpack.c.l.bf16 %v1012
        %v1046 = vunpack.c.l.bf16 %v1013
        %v1047 = vunpack.c.l.bf16 %v1014
        %v1048 = vunpack.c.l.bf16 %v1015
        %v1049 = vunpack.c.l.bf16 %v1016
        %v1050 = vunpack.c.l.bf16 %v1017
        %v1051 = vunpack.c.l.bf16 %v1018
        %v1052 = vunpack.c.l.bf16 %v1019
        %v1053 = vunpack.c.l.bf16 %v1020
        %v1054 = vunpack.c.l.bf16 %v1021
        %v1055 = vunpack.c.l.bf16 %v1022
        %v1056 = vunpack.c.l.bf16 %v1023
        %v1057 = vunpack.c.l.bf16 %v1024
        %v1058 = vunpack.c.l.bf16 %v1025
        %v1059 = vunpack.c.l.bf16 %v1026
        %v1060 = vunpack.c.l.bf16 %v1027
        %v1061 = vunpack.c.l.bf16 %v1028
        %v1062 = vunpack.c.l.bf16 %v1029
        %v1063 = vunpack.c.l.bf16 %v1030
        %v1064 = vunpack.c.l.bf16 %v1031
        %v1065 = vunpack.c.l.bf16 %v1032
        %v1066 = vunpack.c.l.bf16 %v1033
        %v1067 = vunpack.c.l.bf16 %v1034
        %v1068 = vunpack.c.l.bf16 %v1035
        %v1069 = vunpack.c.l.bf16 %v1036
        %v1070 = vunpack.c.l.bf16 %v1037
        %v1071 = vunpack.c.l.bf16 %v1038
        %v1072 = vunpack.c.l.bf16 %v1039
        %v1073 = vunpack.c.l.bf16 %v1040
        %v1074 = vunpack.c.l.bf16 %v1041
        %vm1108 = vcmask 1046528
        %v1109 = vrot.slane %v1042, 1
        %v1110 = vrot.slane %v1043, 1
        %v1111 = vsel %vm1108, %v1109, %v1110
        %v1112 = vrot.slane %v1044, 1
        %v1113 = vsel %vm1108, %v1110, %v1112
        %v1114 = vrot.slane %v1045, 1
        %v1115 = vsel %vm1108, %v1112, %v1114
        %v1116 = vrot.slane %v1046, 1
        %v1117 = vsel %vm1108, %v1114, %v1116
        %v1118 = vrot.slane %v1047, 1
        %v1119 = vsel %vm1108, %v1116, %v1118
        %v1120 = vrot.slane %v1048, 1
        %v1121 = vsel %vm1108, %v1118, %v1120
        %v1122 = vrot.slane %v1049, 1
        %v1123 = vsel %vm1108, %v1120, %v1122
        %v1124 = vrot.slane %v1050, 1
        %v1125 = vsel %vm1108, %v1122, %v1124
        %v1126 = vrot.slane %v1051, 1
        %v1127 = vsel %vm1108, %v1124, %v1126
        %v1128 = vrot.slane %v1052, 1
        %v1129 = vsel %vm1108, %v1126, %v1128
        %v1130 = vrot.slane %v1053, 1
        %v1131 = vsel %vm1108, %v1128, %v1130
        %v1132 = vrot.slane %v1054, 1
        %v1133 = vsel %vm1108, %v1130, %v1132
        %v1134 = vrot.slane %v1055, 1
        %v1135 = vsel %vm1108, %v1132, %v1134
        %v1136 = vrot.slane %v1056, 1
        %v1137 = vsel %vm1108, %v1134, %v1136
        %v1138 = vrot.slane %v1057, 1
        %v1139 = vsel %vm1108, %v1136, %v1138
        %v1140 = vrot.slane %v1058, 1
        %v1141 = vsel %vm1108, %v1138, %v1140
        %v1142 = vrot.slane %v1059, 1
        %v1143 = vsel %vm1108, %v1140, %v1142
        %v1144 = vrot.slane %v1060, 1
        %v1145 = vsel %vm1108, %v1142, %v1144
        %v1146 = vrot.slane %v1061, 1
        %v1147 = vsel %vm1108, %v1144, %v1146
        %v1148 = vrot.slane %v1062, 1
        %v1149 = vsel %vm1108, %v1146, %v1148
        %v1150 = vrot.slane %v1063, 1
        %v1151 = vsel %vm1108, %v1148, %v1150
        %v1152 = vrot.slane %v1064, 1
        %v1153 = vsel %vm1108, %v1150, %v1152
        %v1154 = vrot.slane %v1065, 1
        %v1155 = vsel %vm1108, %v1152, %v1154
        %v1156 = vrot.slane %v1066, 1
        %v1157 = vsel %vm1108, %v1154, %v1156
        %v1158 = vrot.slane %v1067, 1
        %v1159 = vsel %vm1108, %v1156, %v1158
        %v1160 = vrot.slane %v1068, 1
        %v1161 = vsel %vm1108, %v1158, %v1160
        %v1162 = vrot.slane %v1069, 1
        %v1163 = vsel %vm1108, %v1160, %v1162
        %v1164 = vrot.slane %v1070, 1
        %v1165 = vsel %vm1108, %v1162, %v1164
        %v1166 = vrot.slane %v1071, 1
        %v1167 = vsel %vm1108, %v1164, %v1166
        %v1168 = vrot.slane %v1072, 1
        %v1169 = vsel %vm1108, %v1166, %v1168
        %v1170 = vrot.slane %v1073, 1
        %v1171 = vsel %vm1108, %v1168, %v1170
        %v1172 = vrot.slane %v1074, 1
        %v1173 = vsel %vm1108, %v1170, %v1172
        %v1206 = vadd.f32 %v883, %v1111
        %v1207 = vadd.f32 %v886, %v1113
        %v1208 = vadd.f32 %v891, %v1115
        %v1209 = vadd.f32 %v894, %v1117
        %v1210 = vadd.f32 %v899, %v1119
        %v1211 = vadd.f32 %v902, %v1121
        %v1212 = vadd.f32 %v907, %v1123
        %v1213 = vadd.f32 %v910, %v1125
        %v1214 = vadd.f32 %v915, %v1127
        %v1215 = vadd.f32 %v918, %v1129
        %v1216 = vadd.f32 %v923, %v1131
        %v1217 = vadd.f32 %v926, %v1133
        %v1218 = vadd.f32 %v931, %v1135
        %v1219 = vadd.f32 %v934, %v1137
        %v1220 = vadd.f32 %v939, %v1139
        %v1221 = vadd.f32 %v942, %v1141
        %v1222 = vadd.f32 %v947, %v1143
        %v1223 = vadd.f32 %v950, %v1145
        %v1224 = vadd.f32 %v955, %v1147
        %v1225 = vadd.f32 %v958, %v1149
        %v1226 = vadd.f32 %v963, %v1151
        %v1227 = vadd.f32 %v966, %v1153
        %v1228 = vadd.f32 %v971, %v1155
        %v1229 = vadd.f32 %v974, %v1157
        %v1230 = vadd.f32 %v979, %v1159
        %v1231 = vadd.f32 %v982, %v1161
        %v1232 = vadd.f32 %v987, %v1163
        %v1233 = vadd.f32 %v990, %v1165
        %v1234 = vadd.f32 %v995, %v1167
        %v1235 = vadd.f32 %v998, %v1169
        %v1236 = vadd.f32 %v1003, %v1171
        %v1237 = vadd.f32 %v1006, %v1173
        %v1238 = vpack.c.bf16 %v1207, %v1206
        %v1239 = vpack.c.bf16 %v1209, %v1208
        %v1240 = vpack.c.bf16 %v1211, %v1210
        %v1241 = vpack.c.bf16 %v1213, %v1212
        %v1242 = vpack.c.bf16 %v1215, %v1214
        %v1243 = vpack.c.bf16 %v1217, %v1216
        %v1244 = vpack.c.bf16 %v1219, %v1218
        %v1245 = vpack.c.bf16 %v1221, %v1220
        %v1246 = vpack.c.bf16 %v1223, %v1222
        %v1247 = vpack.c.bf16 %v1225, %v1224
        %v1248 = vpack.c.bf16 %v1227, %v1226
        %v1249 = vpack.c.bf16 %v1229, %v1228
        %v1250 = vpack.c.bf16 %v1231, %v1230
        %v1251 = vpack.c.bf16 %v1233, %v1232
        %v1252 = vpack.c.bf16 %v1235, %v1234
        %v1253 = vpack.c.bf16 %v1237, %v1236
        %v1270 = vunpack.c.l.b16 %v1238
        %v1271 = vunpack.c.h.b16 %v1238
        %v1272 = vunpack.c.l.b16 %v1239
        %v1273 = vunpack.c.h.b16 %v1239
        %v1274 = vunpack.c.l.b16 %v1240
        %v1275 = vunpack.c.h.b16 %v1240
        %v1276 = vunpack.c.l.b16 %v1241
        %v1277 = vunpack.c.h.b16 %v1241
        %v1278 = vunpack.c.l.b16 %v1242
        %v1279 = vunpack.c.h.b16 %v1242
        %v1280 = vunpack.c.l.b16 %v1243
        %v1281 = vunpack.c.h.b16 %v1243
        %v1282 = vunpack.c.l.b16 %v1244
        %v1283 = vunpack.c.h.b16 %v1244
        %v1284 = vunpack.c.l.b16 %v1245
        %v1285 = vunpack.c.h.b16 %v1245
        %v1286 = vunpack.c.l.b16 %v1246
        %v1287 = vunpack.c.h.b16 %v1246
        %v1288 = vunpack.c.l.b16 %v1247
        %v1289 = vunpack.c.h.b16 %v1247
        %v1290 = vunpack.c.l.b16 %v1248
        %v1291 = vunpack.c.h.b16 %v1248
        %v1292 = vunpack.c.l.b16 %v1249
        %v1293 = vunpack.c.h.b16 %v1249
        %v1294 = vunpack.c.l.b16 %v1250
        %v1295 = vunpack.c.h.b16 %v1250
        %v1296 = vunpack.c.l.b16 %v1251
        %v1297 = vunpack.c.h.b16 %v1251
        %v1298 = vunpack.c.l.b16 %v1252
        %v1299 = vunpack.c.h.b16 %v1252
        %v1300 = vunpack.c.l.b16 %v1253
        %v1301 = vunpack.c.h.b16 %v1253
        %v1302 = vpack.c.b16 %v1270, %v1270
        %v1303 = vpack.c.b16 %v1271, %v1271
        %v1304 = vpack.c.b16 %v1272, %v1272
        %v1305 = vpack.c.b16 %v1273, %v1273
        %v1306 = vpack.c.b16 %v1274, %v1274
        %v1307 = vpack.c.b16 %v1275, %v1275
        %v1308 = vpack.c.b16 %v1276, %v1276
        %v1309 = vpack.c.b16 %v1277, %v1277
        %v1310 = vpack.c.b16 %v1278, %v1278
        %v1311 = vpack.c.b16 %v1279, %v1279
        %v1312 = vpack.c.b16 %v1280, %v1280
        %v1313 = vpack.c.b16 %v1281, %v1281
        %v1314 = vpack.c.b16 %v1282, %v1282
        %v1315 = vpack.c.b16 %v1283, %v1283
        %v1316 = vpack.c.b16 %v1284, %v1284
        %v1317 = vpack.c.b16 %v1285, %v1285
        %v1318 = vpack.c.b16 %v1286, %v1286
        %v1319 = vpack.c.b16 %v1287, %v1287
        %v1320 = vpack.c.b16 %v1288, %v1288
        %v1321 = vpack.c.b16 %v1289, %v1289
        %v1322 = vpack.c.b16 %v1290, %v1290
        %v1323 = vpack.c.b16 %v1291, %v1291
        %v1324 = vpack.c.b16 %v1292, %v1292
        %v1325 = vpack.c.b16 %v1293, %v1293
        %v1326 = vpack.c.b16 %v1294, %v1294
        %v1327 = vpack.c.b16 %v1295, %v1295
        %v1328 = vpack.c.b16 %v1296, %v1296
        %v1329 = vpack.c.b16 %v1297, %v1297
        %v1330 = vpack.c.b16 %v1298, %v1298
        %v1331 = vpack.c.b16 %v1299, %v1299
        %v1332 = vpack.c.b16 %v1300, %v1300
        %v1333 = vpack.c.b16 %v1301, %v1301
        %1366 = vst [vmem:[%s271] sm:$0xf] %v1302
        %1367 = vst [vmem:[%s271 + $0x4] sm:$0xf] %v1303
        %1368 = vst [vmem:[%s271 + $0x8] sm:$0xf] %v1304
        %1369 = vst [vmem:[%s271 + $0xc] sm:$0xf] %v1305
        %1370 = vst [vmem:[%s271 + $0x10] sm:$0xf] %v1306
        %1371 = vst [vmem:[%s271 + $0x14] sm:$0xf] %v1307
        %1372 = vst [vmem:[%s271 + $0x18] sm:$0xf] %v1308
        %1373 = vst [vmem:[%s271 + $0x1c] sm:$0xf] %v1309
        %1374 = vst [vmem:[%s271 + $0x20] sm:$0xf] %v1310
        %1375 = vst [vmem:[%s271 + $0x24] sm:$0xf] %v1311
        %1376 = vst [vmem:[%s271 + $0x28] sm:$0xf] %v1312
        %1377 = vst [vmem:[%s271 + $0x2c] sm:$0xf] %v1313
        %1378 = vst [vmem:[%s271 + $0x30] sm:$0xf] %v1314
        %1379 = vst [vmem:[%s271 + $0x34] sm:$0xf] %v1315
        %1380 = vst [vmem:[%s271 + $0x38] sm:$0xf] %v1316
        %1381 = vst [vmem:[%s271 + $0x3c] sm:$0xf] %v1317
        %1382 = vst [vmem:[%s271 + $0x40] sm:$0xf] %v1318
        %1383 = vst [vmem:[%s271 + $0x44] sm:$0xf] %v1319
        %1384 = vst [vmem:[%s271 + $0x48] sm:$0xf] %v1320
        %1385 = vst [vmem:[%s271 + $0x4c] sm:$0xf] %v1321
        %1386 = vst [vmem:[%s271 + $0x50] sm:$0xf] %v1322
        %1387 = vst [vmem:[%s271 + $0x54] sm:$0xf] %v1323
        %1388 = vst [vmem:[%s271 + $0x58] sm:$0xf] %v1324
        %1389 = vst [vmem:[%s271 + $0x5c] sm:$0xf] %v1325
        %1390 = vst [vmem:[%s271 + $0x60] sm:$0xf] %v1326
        %1391 = vst [vmem:[%s271 + $0x64] sm:$0xf] %v1327
        %1392 = vst [vmem:[%s271 + $0x68] sm:$0xf] %v1328
        %1393 = vst [vmem:[%s271 + $0x6c] sm:$0xf] %v1329
        %1394 = vst [vmem:[%s271 + $0x70] sm:$0xf] %v1330
        %1395 = vst [vmem:[%s271 + $0x74] sm:$0xf] %v1331
        %1396 = vst [vmem:[%s271 + $0x78] sm:$0xf] %v1332
        %1397 = vst [vmem:[%s271 + $0x7c] sm:$0xf] %v1333
        %s1398 = sand.u32 %s155, 1
        %s1399 = scalar_lea.sflag [#allocation5], %s1398
        %s1400 = sand.u32 %s155, 1
        %s1401 = smul.addr %s1400, 128
        %s1402 = scalar_lea.vmem [#allocation8], %s1401
        // Predicated region
        $region49: #{tpu_custom_call.1} parent=39 // pred_check
          %p1403 = pneg %p165
        $region50: #{tpu_custom_call.1} parent=39 // pred_check_branch
          %1405 = sbr.rel (%p1403) target = $region52
        $region51: #{tpu_custom_call.1} parent=39 // pred_region
          %s1406 = smul.u32 32, %s28
          %s1408 = ssub.s32 2048, 2048
          %1409 = vsyncadd %s1399, %s1408
          %s1410 = smul.addr %s27, 32
          %s1411 = sadd.s32 %s1406, %s1410
          %s1412 = smul.addr %s1411, 64
          %s1413 = scalar_lea.hbm %s5, %s1412
          %s1414 = sshll.u32 %s1402, 4
          %s1415 = int_to_ptr.vmem [resolvable:$true] %s1414
          %1420 = dma.vmem_to_hbm [thread:$0]  %s1415, 2048, %s1413, %s1399, 64, 64, 4
        $region52: #{tpu_custom_call.1} parent=39 // pred_fallthru
          _
      $region40: #{tpu_custom_call.1} parent=5 // pred_fallthru
        _
      %p1421 = scmp.le.s32.totalorder 2, %s18
      // Predicated region
      $region53: #{tpu_custom_call.1} parent=5 // pred_check
        %p1422 = pneg %p1421
      $region54: #{tpu_custom_call.1} parent=5 // pred_check_branch
        %1424 = sbr.rel (%p1422) target = $region56
      $region55: #{tpu_custom_call.1} parent=5 // pred_region
        %s1425 = ssub.s32 %s18, 2
        // Predicated region
        $region57: #{tpu_custom_call.1} parent=55 // pred_check
          %p1426 = pneg %p171
        $region58: #{tpu_custom_call.1} parent=55 // pred_check_branch
          %1428 = sbr.rel (%p1426) target = $region60
        $region59: #{tpu_custom_call.1} parent=55 // pred_region
          %s1429 = sand.u32 %s156, 1
          %s1430 = scalar_lea.sflag [#allocation5], %s1429
          %s1431 = sand.u32 %s156, 1
          %s1432 = smul.addr %s1431, 128
          %s1433 = scalar_lea.vmem [#allocation8], %s1432
          %1434 = dma.done %s1430, 2048
        $region60: #{tpu_custom_call.1} parent=55 // pred_fallthru
          _
      $region56: #{tpu_custom_call.1} parent=5 // pred_fallthru
        _
    $region6: #{tpu_custom_call.1} parent=1 // loop_footer
      %s22 = sadd.s32 1, %s18
    $region7: #{tpu_custom_call.1} parent=1 // loop_footer_branch
      %17 = sbr.rel target = $region3
    $region8: #{tpu_custom_call.1} parent=1 // loop_exit
      _
    %1435 = vsyncpa [#allocation4], 1
    %s1436 = scalar_lea.sflag [#allocation4], 1
    %1437 = vsyncpa %s1436, 1
    %1438 = vsyncpa [#allocation7], 1
    %1439 = vsyncpa [#allocation5], 1
    %s1440 = scalar_lea.sflag [#allocation5], 1
    %1441 = vsyncpa %s1440, 1

</llo_original>
